<compile_context>
chip_gen: v6e
topology: v6e:2x2x1
jax: 0.10.0
libtpu: 0.0.40
codegen_flags: <defaults>
</compile_context>

<pallas_src>
import numpy as np
import jax
import jax.numpy as jnp
from jax.experimental import pallas as pl
from jax.experimental.pallas import tpu as pltpu

# settings implied by the module
Z_DIM = 128          # settings['z_dim']
W_DIM = 128          # settings['w_dim']   (== Z_DIM; stacking of layers 1..6 relies on this)
LABEL_SIZE = 8       # label_size (use_labels=True)
EPS = 1e-8           # settings['epsilon']
GAIN = float(np.sqrt(2.0))
N_LAYERS = 7         # WSConv2d 1x1 stack inside latent_transform

# Batch tile: big enough that the 7-matmul chain amortizes its fixed MXU latency,
# small enough that double-buffered activation tiles (BM x 256 f32 in, BM x 128 f32 out)
# stay far under the default scoped-VMEM limit on v5e/v6e/v7x (~1.3 MiB total here).
BM = 256


def latent_transform_kernel(x_ref, w0_ref, ws_ref, b_ref, out_ref):
    # x_ref : (BM, 2Z) f32   latent ‖ label-embedding (pre-concatenated, lane-dense)
    # w0_ref: (2Z, Z)  bf16  layer-0 weight, WS scale already folded in
    # ws_ref: (6, Z, Z) bf16 layers 1..6 weights, WS scale folded in
    # b_ref : (8, Z)   f32   rows 0..6 = biases, row 7 = padding
    x = x_ref[...]
    two_z = x.shape[1]

    # PixelNorm over the 2Z channel axis (lanes)
    inv = jax.lax.rsqrt(jnp.sum(x * x, axis=1, keepdims=True) * (1.0 / two_z) + EPS)
    h = (x * inv).astype(jnp.bfloat16)

    def leaky(v):                       # LeakyReLU(0.2): single max, exact for slope 0.2
        return jnp.maximum(v, 0.2 * v)

    # layer 0: single K=256 bf16 matmul, f32 accumulation
    y = jnp.dot(h, w0_ref[...], preferred_element_type=jnp.float32)
    h = leaky(y + b_ref[0:1, :])

    # layers 1..6: one bf16 matmul each (static index into the stacked weight block)
    for i in range(ws_ref.shape[0]):
        y = jnp.dot(h.astype(jnp.bfloat16), ws_ref[i],
                    preferred_element_type=jnp.float32)
        h = leaky(y + b_ref[i + 1:i + 2, :])

    out_ref[...] = h                    # (BM, W_DIM) f32, lane-dense unmasked stores


def make_params(key):
    """Deterministic init matching the module: normal weights/embedding, zero bias."""
    ks = jax.random.split(key, N_LAYERS + 1)
    p = {'embed': jax.random.normal(ks[0], (LABEL_SIZE, Z_DIM), jnp.float32)}
    in_chs = [2 * Z_DIM] + [Z_DIM] * 6
    out_chs = [Z_DIM] * 6 + [W_DIM]
    for i, (ci, co) in enumerate(zip(in_chs, out_chs)):
        p[f'w{i}'] = jax.random.normal(ks[i + 1], (co, ci, 1, 1), jnp.float32)  # OIHW
        p[f'b{i}'] = jnp.zeros((co,), jnp.float32)
    return p


def _repack_w(w, cin):
    """OIHW (Cout,Cin,1,1) -> (Cin,Cout) bf16 with the WS scale folded in pre-cast."""
    cout = w.shape[0]
    s = GAIN / np.sqrt(cin * 1 * 1)
    return (jnp.transpose(w.reshape(cout, cin)) * s).astype(jnp.bfloat16)


@jax.jit
def latent_transformation_forward(latent, labels, params):
    B = latent.shape[0]
    lat = latent.reshape(B, Z_DIM).astype(jnp.float32)
    emb = params['embed'][labels].astype(jnp.float32)            # tiny XLA gather
    x = jnp.concatenate([lat, emb], axis=1)                      # (B, 2Z)

    # Pad the batch up to a multiple of BM so every MXU pass sees full rows; the
    # extra rows are finite garbage (rsqrt(eps) is finite) and get sliced off below.
    Bp = ((B + BM - 1) // BM) * BM
    if Bp != B:
        x = jnp.pad(x, ((0, Bp - B), (0, 0)))

    w0 = _repack_w(params['w0'], 2 * Z_DIM)                      # (2Z, Z) bf16
    ws = jnp.stack([_repack_w(params[f'w{i}'], Z_DIM)            # (6, Z, Z) bf16
                    for i in range(1, N_LAYERS)])
    b = jnp.zeros((8, Z_DIM), jnp.float32)                       # (8, Z) f32, row 7 pad
    for i in range(N_LAYERS):
        b = b.at[i].set(params[f'b{i}'].astype(jnp.float32))

    out = pl.pallas_call(
        latent_transform_kernel,
        out_shape=jax.ShapeDtypeStruct((Bp, W_DIM), jnp.float32),
        grid_spec=pltpu.PrefetchScalarGridSpec(
            num_scalar_prefetch=0,
            grid=(Bp // BM,),
            in_specs=[
                pl.BlockSpec((BM, 2 * Z_DIM), lambda i: (i, 0)),           # activations
                pl.BlockSpec((2 * Z_DIM, Z_DIM), lambda i: (0, 0)),        # w0 (resident)
                pl.BlockSpec((N_LAYERS - 1, Z_DIM, Z_DIM),
                             lambda i: (0, 0, 0)),                         # w1..w6 (resident)
                pl.BlockSpec((8, Z_DIM), lambda i: (0, 0)),                # biases (resident)
            ],
            out_specs=pl.BlockSpec((BM, W_DIM), lambda i: (i, 0)),
        ),
        compiler_params=pltpu.CompilerParams(
            dimension_semantics=("parallel",)),   # batch tiles are independent (megacore)
    )(x, w0, ws, b)

    return out[:B].reshape(B, W_DIM, 1, 1)                       # match PyTorch NCHW output


# ---------------- pure-JAX f32 reference (mirrors the PyTorch forward) ----------------
def reference_forward(latent, labels, p):
    B = latent.shape[0]
    lat = latent.reshape(B, Z_DIM)
    emb = p['embed'][labels]                                      # nn.Embedding lookup
    x = jnp.concatenate([lat, emb], axis=1)                       # (B, 2Z)
    x = x * jax.lax.rsqrt(jnp.mean(x * x, axis=1, keepdims=True) + EPS)  # PixelNorm
    act = lambda v: jnp.where(v >= 0, v, 0.2 * v)
    for i in range(N_LAYERS):
        w, b = p[f'w{i}'], p[f'b{i}']                             # OIHW 1x1
        cout, cin = w.shape[0], w.shape[1]
        s = GAIN / np.sqrt(cin * 1 * 1)
        x = act(x @ (w.reshape(cout, cin) * s).T + b.reshape(1, cout))
    return x.reshape(B, W_DIM, 1, 1)


if __name__ == "__main__":
    key = jax.random.PRNGKey(0)
    kp, kx, kl = jax.random.split(key, 3)
    params = make_params(kp)

    B = 8
    latent = jax.random.normal(kx, (B, Z_DIM), jnp.float32)
    labels = jax.random.randint(kl, (B,), 0, LABEL_SIZE, jnp.int32)

    out = latent_transformation_forward(latent, labels, params)
    jax.block_until_ready(out)

    ref = reference_forward(latent, labels, params)
    # bf16 weight streaming across 7 chained matmuls -> relaxed tolerance
    np.testing.assert_allclose(np.asarray(out), np.asarray(ref), rtol=5e-2, atol=5e-2)
    print("KERNEL_OK")
</pallas_src>

<mosaic_0001>
module attributes {stable_mosaic.version = 11 : i64} {
  func.func @latent_transform_kernel(%arg0: i32, %arg1: memref<256x256xf32, #tpu.memory_space<vmem>>, %arg2: memref<256x128xbf16, #tpu.memory_space<vmem>>, %arg3: memref<6x128x128xbf16, #tpu.memory_space<vmem>>, %arg4: memref<8x128xf32, #tpu.memory_space<vmem>>, %arg5: memref<256x128xf32, #tpu.memory_space<vmem>>) attributes {dimension_semantics = [#tpu.dimension_semantics<parallel>], iteration_bounds = array<i64: 1>, scalar_prefetch = 0 : i64, scratch_operands = 0 : i64, tpu.core_type = #tpu.core_type<tc>, window_params = [{transform_indices = @transform_0, window_bounds = array<i64: 256, 256>}, {pipeline_mode = #tpu.pipeline_mode<synchronous>, transform_indices = @transform_1, window_bounds = array<i64: 256, 128>}, {pipeline_mode = #tpu.pipeline_mode<synchronous>, transform_indices = @transform_2, window_bounds = array<i64: 6, 128, 128>}, {pipeline_mode = #tpu.pipeline_mode<synchronous>, transform_indices = @transform_3, window_bounds = array<i64: 8, 128>}, {transform_indices = @transform_4, window_bounds = array<i64: 256, 128>}]} {
    %c0 = arith.constant 0 : index
    %c0_0 = arith.constant 0 : index
    %0 = vector.load %arg1[%c0, %c0_0] : memref<256x256xf32, #tpu.memory_space<vmem>>, vector<256x256xf32>
    %1 = arith.mulf %0, %0 : vector<256x256xf32>
    %cst = arith.constant dense<0.000000e+00> : vector<256xf32>
    %2 = vector.multi_reduction <add>, %1, %cst [1] : vector<256x256xf32> to vector<256xf32>
    %3 = vector.shape_cast %2 : vector<256xf32> to vector<256x1xf32>
    %cst_1 = arith.constant 3.906250e-03 : f32
    %4 = vector.broadcast %cst_1 : f32 to vector<256x1xf32>
    %5 = arith.mulf %3, %4 : vector<256x1xf32>
    %cst_2 = arith.constant 9.99999993E-9 : f32
    %6 = vector.broadcast %cst_2 : f32 to vector<256x1xf32>
    %7 = arith.addf %5, %6 : vector<256x1xf32>
    %8 = math.rsqrt %7 : vector<256x1xf32>
    %9 = vector.broadcast %8 : vector<256x1xf32> to vector<256x256xf32>
    %10 = arith.mulf %0, %9 : vector<256x256xf32>
    %11 = arith.truncf %10 : vector<256x256xf32> to vector<256x256xbf16>
    %c0_3 = arith.constant 0 : index
    %c0_4 = arith.constant 0 : index
    %12 = vector.load %arg2[%c0_3, %c0_4] : memref<256x128xbf16, #tpu.memory_space<vmem>>, vector<256x128xbf16>
    %cst_5 = arith.constant dense<0.000000e+00> : vector<256x128xf32>
    %13 = tpu.matmul %11, %12, %cst_5 {dimension_numbers = #tpu.dot_dimension_numbers<[1], [0], [0], [1], [0, 0, 1, 1], [], []>} : vector<256x256xbf16>, vector<256x128xbf16>, vector<256x128xf32> -> vector<256x128xf32>
    %c0_6 = arith.constant 0 : index
    %c0_7 = arith.constant 0 : index
    %14 = vector.load %arg4[%c0_6, %c0_7] : memref<8x128xf32, #tpu.memory_space<vmem>>, vector<1x128xf32>
    %15 = vector.broadcast %14 : vector<1x128xf32> to vector<256x128xf32>
    %16 = arith.addf %13, %15 : vector<256x128xf32>
    %cst_8 = arith.constant 2.000000e-01 : f32
    %17 = vector.broadcast %cst_8 : f32 to vector<256x128xf32>
    %18 = arith.mulf %17, %16 : vector<256x128xf32>
    %19 = arith.maximumf %16, %18 : vector<256x128xf32>
    %20 = arith.truncf %19 : vector<256x128xf32> to vector<256x128xbf16>
    %c0_9 = arith.constant 0 : index
    %c0_10 = arith.constant 0 : index
    %c0_11 = arith.constant 0 : index
    %21 = vector.load %arg3[%c0_9, %c0_10, %c0_11] : memref<6x128x128xbf16, #tpu.memory_space<vmem>>, vector<1x128x128xbf16>
    %22 = vector.shape_cast %21 : vector<1x128x128xbf16> to vector<128x128xbf16>
    %cst_12 = arith.constant dense<0.000000e+00> : vector<256x128xf32>
    %23 = tpu.matmul %20, %22, %cst_12 {dimension_numbers = #tpu.dot_dimension_numbers<[1], [0], [0], [1], [0, 0, 1, 1], [], []>} : vector<256x128xbf16>, vector<128x128xbf16>, vector<256x128xf32> -> vector<256x128xf32>
    %c1 = arith.constant 1 : index
    %c0_13 = arith.constant 0 : index
    %24 = vector.load %arg4[%c1, %c0_13] : memref<8x128xf32, #tpu.memory_space<vmem>>, vector<1x128xf32>
    %25 = vector.broadcast %24 : vector<1x128xf32> to vector<256x128xf32>
    %26 = arith.addf %23, %25 : vector<256x128xf32>
    %cst_14 = arith.constant 2.000000e-01 : f32
    %27 = vector.broadcast %cst_14 : f32 to vector<256x128xf32>
    %28 = arith.mulf %27, %26 : vector<256x128xf32>
    %29 = arith.maximumf %26, %28 : vector<256x128xf32>
    %30 = arith.truncf %29 : vector<256x128xf32> to vector<256x128xbf16>
    %c1_15 = arith.constant 1 : index
    %c0_16 = arith.constant 0 : index
    %c0_17 = arith.constant 0 : index
    %31 = vector.load %arg3[%c1_15, %c0_16, %c0_17] : memref<6x128x128xbf16, #tpu.memory_space<vmem>>, vector<1x128x128xbf16>
    %32 = vector.shape_cast %31 : vector<1x128x128xbf16> to vector<128x128xbf16>
    %cst_18 = arith.constant dense<0.000000e+00> : vector<256x128xf32>
    %33 = tpu.matmul %30, %32, %cst_18 {dimension_numbers = #tpu.dot_dimension_numbers<[1], [0], [0], [1], [0, 0, 1, 1], [], []>} : vector<256x128xbf16>, vector<128x128xbf16>, vector<256x128xf32> -> vector<256x128xf32>
    %c2 = arith.constant 2 : index
    %c0_19 = arith.constant 0 : index
    %34 = vector.load %arg4[%c2, %c0_19] : memref<8x128xf32, #tpu.memory_space<vmem>>, vector<1x128xf32>
    %35 = vector.broadcast %34 : vector<1x128xf32> to vector<256x128xf32>
    %36 = arith.addf %33, %35 : vector<256x128xf32>
    %cst_20 = arith.constant 2.000000e-01 : f32
    %37 = vector.broadcast %cst_20 : f32 to vector<256x128xf32>
    %38 = arith.mulf %37, %36 : vector<256x128xf32>
    %39 = arith.maximumf %36, %38 : vector<256x128xf32>
    %40 = arith.truncf %39 : vector<256x128xf32> to vector<256x128xbf16>
    %c2_21 = arith.constant 2 : index
    %c0_22 = arith.constant 0 : index
    %c0_23 = arith.constant 0 : index
    %41 = vector.load %arg3[%c2_21, %c0_22, %c0_23] : memref<6x128x128xbf16, #tpu.memory_space<vmem>>, vector<1x128x128xbf16>
    %42 = vector.shape_cast %41 : vector<1x128x128xbf16> to vector<128x128xbf16>
    %cst_24 = arith.constant dense<0.000000e+00> : vector<256x128xf32>
    %43 = tpu.matmul %40, %42, %cst_24 {dimension_numbers = #tpu.dot_dimension_numbers<[1], [0], [0], [1], [0, 0, 1, 1], [], []>} : vector<256x128xbf16>, vector<128x128xbf16>, vector<256x128xf32> -> vector<256x128xf32>
    %c3 = arith.constant 3 : index
    %c0_25 = arith.constant 0 : index
    %44 = vector.load %arg4[%c3, %c0_25] : memref<8x128xf32, #tpu.memory_space<vmem>>, vector<1x128xf32>
    %45 = vector.broadcast %44 : vector<1x128xf32> to vector<256x128xf32>
    %46 = arith.addf %43, %45 : vector<256x128xf32>
    %cst_26 = arith.constant 2.000000e-01 : f32
    %47 = vector.broadcast %cst_26 : f32 to vector<256x128xf32>
    %48 = arith.mulf %47, %46 : vector<256x128xf32>
    %49 = arith.maximumf %46, %48 : vector<256x128xf32>
    %50 = arith.truncf %49 : vector<256x128xf32> to vector<256x128xbf16>
    %c3_27 = arith.constant 3 : index
    %c0_28 = arith.constant 0 : index
    %c0_29 = arith.constant 0 : index
    %51 = vector.load %arg3[%c3_27, %c0_28, %c0_29] : memref<6x128x128xbf16, #tpu.memory_space<vmem>>, vector<1x128x128xbf16>
    %52 = vector.shape_cast %51 : vector<1x128x128xbf16> to vector<128x128xbf16>
    %cst_30 = arith.constant dense<0.000000e+00> : vector<256x128xf32>
    %53 = tpu.matmul %50, %52, %cst_30 {dimension_numbers = #tpu.dot_dimension_numbers<[1], [0], [0], [1], [0, 0, 1, 1], [], []>} : vector<256x128xbf16>, vector<128x128xbf16>, vector<256x128xf32> -> vector<256x128xf32>
    %c4 = arith.constant 4 : index
    %c0_31 = arith.constant 0 : index
    %54 = vector.load %arg4[%c4, %c0_31] : memref<8x128xf32, #tpu.memory_space<vmem>>, vector<1x128xf32>
    %55 = vector.broadcast %54 : vector<1x128xf32> to vector<256x128xf32>
    %56 = arith.addf %53, %55 : vector<256x128xf32>
    %cst_32 = arith.constant 2.000000e-01 : f32
    %57 = vector.broadcast %cst_32 : f32 to vector<256x128xf32>
    %58 = arith.mulf %57, %56 : vector<256x128xf32>
    %59 = arith.maximumf %56, %58 : vector<256x128xf32>
    %60 = arith.truncf %59 : vector<256x128xf32> to vector<256x128xbf16>
    %c4_33 = arith.constant 4 : index
    %c0_34 = arith.constant 0 : index
    %c0_35 = arith.constant 0 : index
    %61 = vector.load %arg3[%c4_33, %c0_34, %c0_35] : memref<6x128x128xbf16, #tpu.memory_space<vmem>>, vector<1x128x128xbf16>
    %62 = vector.shape_cast %61 : vector<1x128x128xbf16> to vector<128x128xbf16>
    %cst_36 = arith.constant dense<0.000000e+00> : vector<256x128xf32>
    %63 = tpu.matmul %60, %62, %cst_36 {dimension_numbers = #tpu.dot_dimension_numbers<[1], [0], [0], [1], [0, 0, 1, 1], [], []>} : vector<256x128xbf16>, vector<128x128xbf16>, vector<256x128xf32> -> vector<256x128xf32>
    %c5 = arith.constant 5 : index
    %c0_37 = arith.constant 0 : index
    %64 = vector.load %arg4[%c5, %c0_37] : memref<8x128xf32, #tpu.memory_space<vmem>>, vector<1x128xf32>
    %65 = vector.broadcast %64 : vector<1x128xf32> to vector<256x128xf32>
    %66 = arith.addf %63, %65 : vector<256x128xf32>
    %cst_38 = arith.constant 2.000000e-01 : f32
    %67 = vector.broadcast %cst_38 : f32 to vector<256x128xf32>
    %68 = arith.mulf %67, %66 : vector<256x128xf32>
    %69 = arith.maximumf %66, %68 : vector<256x128xf32>
    %70 = arith.truncf %69 : vector<256x128xf32> to vector<256x128xbf16>
    %c5_39 = arith.constant 5 : index
    %c0_40 = arith.constant 0 : index
    %c0_41 = arith.constant 0 : index
    %71 = vector.load %arg3[%c5_39, %c0_40, %c0_41] : memref<6x128x128xbf16, #tpu.memory_space<vmem>>, vector<1x128x128xbf16>
    %72 = vector.shape_cast %71 : vector<1x128x128xbf16> to vector<128x128xbf16>
    %cst_42 = arith.constant dense<0.000000e+00> : vector<256x128xf32>
    %73 = tpu.matmul %70, %72, %cst_42 {dimension_numbers = #tpu.dot_dimension_numbers<[1], [0], [0], [1], [0, 0, 1, 1], [], []>} : vector<256x128xbf16>, vector<128x128xbf16>, vector<256x128xf32> -> vector<256x128xf32>
    %c6 = arith.constant 6 : index
    %c0_43 = arith.constant 0 : index
    %74 = vector.load %arg4[%c6, %c0_43] : memref<8x128xf32, #tpu.memory_space<vmem>>, vector<1x128xf32>
    %75 = vector.broadcast %74 : vector<1x128xf32> to vector<256x128xf32>
    %76 = arith.addf %73, %75 : vector<256x128xf32>
    %cst_44 = arith.constant 2.000000e-01 : f32
    %77 = vector.broadcast %cst_44 : f32 to vector<256x128xf32>
    %78 = arith.mulf %77, %76 : vector<256x128xf32>
    %79 = arith.maximumf %76, %78 : vector<256x128xf32>
    %c0_45 = arith.constant 0 : index
    %c0_46 = arith.constant 0 : index
    %80 = vector.load %arg5[%c0_45, %c0_46] : memref<256x128xf32, #tpu.memory_space<vmem>>, vector<256x128xf32>
    tpu.vector_store %arg5[%c0_45, %c0_46], %79 {strides = array<i32>} : memref<256x128xf32, #tpu.memory_space<vmem>>, vector<256x128xf32>,
    return
  }
  func.func @transform_0(%arg0: i32) -> (i32, i32) {
    %c0_i32 = arith.constant 0 : i32
    %c0_i32_0 = arith.constant 0 : i32
    return %arg0, %c0_i32 : i32, i32
  }
  func.func @transform_1(%arg0: i32) -> (i32, i32) {
    %c0_i32 = arith.constant 0 : i32
    %c0_i32_0 = arith.constant 0 : i32
    %c0_i32_1 = arith.constant 0 : i32
    return %c0_i32, %c0_i32_0 : i32, i32
  }
  func.func @transform_2(%arg0: i32) -> (i32, i32, i32) {
    %c0_i32 = arith.constant 0 : i32
    %c0_i32_0 = arith.constant 0 : i32
    %c0_i32_1 = arith.constant 0 : i32
    %c0_i32_2 = arith.constant 0 : i32
    return %c0_i32, %c0_i32_0, %c0_i32_1 : i32, i32, i32
  }
  func.func @transform_3(%arg0: i32) -> (i32, i32) {
    %c0_i32 = arith.constant 0 : i32
    %c0_i32_0 = arith.constant 0 : i32
    %c0_i32_1 = arith.constant 0 : i32
    return %c0_i32, %c0_i32_0 : i32, i32
  }
  func.func @transform_4(%arg0: i32) -> (i32, i32) {
    %c0_i32 = arith.constant 0 : i32
    %c0_i32_0 = arith.constant 0 : i32
    return %arg0, %c0_i32 : i32, i32
  }
}

</mosaic_0001>

<llo_original>
// kernel: latent_transformation_forward.1
$region0: #{latent_transformation_forward.1}
  #allocation0 [shape = 'u32[]', space=smem, size = 0x4, offset = 0x4, fixed_abs, tag = 'smem constant byte address 0x4 - core index']
  #allocation1 [shape = 'u32[144,128]{1,0:T(1,128)}', space=vmem, size = 0x12000, scoped, tag = 'internal scratch']
  %s0 = inlined_call_operand.vmem [shape: f32[256,256], index: 0, kind: input, shape index: {}]
  %s1 = inlined_call_operand.vmem [shape: bf16[256,128], index: 1, kind: input, shape index: {}]
  %s2 = inlined_call_operand.vmem [shape: bf16[6,128,128], index: 2, kind: input, shape index: {}]
  %s3 = inlined_call_operand.vmem [shape: f32[8,128], index: 3, kind: input, shape index: {}]
  %s4 = inlined_call_operand.vmem [shape: f32[256,128], index: 4, kind: output, shape index: {}]
  %s5 = sld [smem:[#allocation0]]
  $region26: #{latent_transformation_forward.1} parent=0
    _
  %s7 = ssub.s32 1, %s5
  %s8 = scalar_select 0, %s7, %s5
  // Predicated region
  $region2: #{latent_transformation_forward.1} parent=0 // pred_check
    _
  $region3: #{latent_transformation_forward.1} parent=0 // pred_check_branch
    %10 = sbr.rel (0) target = $region5
  $region4: #{latent_transformation_forward.1} parent=0 // pred_region
    _
  $region5: #{latent_transformation_forward.1} parent=0 // pred_fallthru
    _
  // Predicated region
  $region6: #{latent_transformation_forward.1} parent=0 // pred_check
    _
  $region7: #{latent_transformation_forward.1} parent=0 // pred_check_branch
    %12 = sbr.rel (0) target = $region9
  $region8: #{latent_transformation_forward.1} parent=0 // pred_region
    _
  $region9: #{latent_transformation_forward.1} parent=0 // pred_fallthru
    _
  // Predicated region
  $region10: #{latent_transformation_forward.1} parent=0 // pred_check
    _
  $region11: #{latent_transformation_forward.1} parent=0 // pred_check_branch
    %14 = sbr.rel (0) target = $region13
  $region12: #{latent_transformation_forward.1} parent=0 // pred_region
    _
  $region13: #{latent_transformation_forward.1} parent=0 // pred_fallthru
    _
  // Predicated region
  $region14: #{latent_transformation_forward.1} parent=0 // pred_check
    _
  $region15: #{latent_transformation_forward.1} parent=0 // pred_check_branch
    %16 = sbr.rel (0) target = $region17
  $region16: #{latent_transformation_forward.1} parent=0 // pred_region
    _
  $region17: #{latent_transformation_forward.1} parent=0 // pred_fallthru
    _
  %v18 = vld [vmem:[%s0] sm:$0xff]
  %v19 = vld [vmem:[%s0 + $0x8] sm:$0xff]
  %v20 = vld [vmem:[%s0 + $0x10] sm:$0xff]
  %v21 = vld [vmem:[%s0 + $0x18] sm:$0xff]
  %v22 = vld [vmem:[%s0 + $0x20] sm:$0xff]
  %v23 = vld [vmem:[%s0 + $0x28] sm:$0xff]
  %v24 = vld [vmem:[%s0 + $0x30] sm:$0xff]
  %v25 = vld [vmem:[%s0 + $0x38] sm:$0xff]
  %v26 = vld [vmem:[%s0 + $0x40] sm:$0xff]
  %v27 = vld [vmem:[%s0 + $0x48] sm:$0xff]
  %v28 = vld [vmem:[%s0 + $0x50] sm:$0xff]
  %v29 = vld [vmem:[%s0 + $0x58] sm:$0xff]
  %v30 = vld [vmem:[%s0 + $0x60] sm:$0xff]
  %v31 = vld [vmem:[%s0 + $0x68] sm:$0xff]
  %v32 = vld [vmem:[%s0 + $0x70] sm:$0xff]
  %v33 = vld [vmem:[%s0 + $0x78] sm:$0xff]
  %v34 = vld [vmem:[%s0 + $0x80] sm:$0xff]
  %v35 = vld [vmem:[%s0 + $0x88] sm:$0xff]
  %v36 = vld [vmem:[%s0 + $0x90] sm:$0xff]
  %v37 = vld [vmem:[%s0 + $0x98] sm:$0xff]
  %v38 = vld [vmem:[%s0 + $0xa0] sm:$0xff]
  %v39 = vld [vmem:[%s0 + $0xa8] sm:$0xff]
  %v40 = vld [vmem:[%s0 + $0xb0] sm:$0xff]
  %v41 = vld [vmem:[%s0 + $0xb8] sm:$0xff]
  %v42 = vld [vmem:[%s0 + $0xc0] sm:$0xff]
  %v43 = vld [vmem:[%s0 + $0xc8] sm:$0xff]
  %v44 = vld [vmem:[%s0 + $0xd0] sm:$0xff]
  %v45 = vld [vmem:[%s0 + $0xd8] sm:$0xff]
  %v46 = vld [vmem:[%s0 + $0xe0] sm:$0xff]
  %v47 = vld [vmem:[%s0 + $0xe8] sm:$0xff]
  %v48 = vld [vmem:[%s0 + $0xf0] sm:$0xff]
  %v49 = vld [vmem:[%s0 + $0xf8] sm:$0xff]
  %v50 = vld [vmem:[%s0 + $0x100] sm:$0xff]
  %v51 = vld [vmem:[%s0 + $0x108] sm:$0xff]
  %v52 = vld [vmem:[%s0 + $0x110] sm:$0xff]
  %v53 = vld [vmem:[%s0 + $0x118] sm:$0xff]
  %v54 = vld [vmem:[%s0 + $0x120] sm:$0xff]
  %v55 = vld [vmem:[%s0 + $0x128] sm:$0xff]
  %v56 = vld [vmem:[%s0 + $0x130] sm:$0xff]
  %v57 = vld [vmem:[%s0 + $0x138] sm:$0xff]
  %v58 = vld [vmem:[%s0 + $0x140] sm:$0xff]
  %v59 = vld [vmem:[%s0 + $0x148] sm:$0xff]
  %v60 = vld [vmem:[%s0 + $0x150] sm:$0xff]
  %v61 = vld [vmem:[%s0 + $0x158] sm:$0xff]
  %v62 = vld [vmem:[%s0 + $0x160] sm:$0xff]
  %v63 = vld [vmem:[%s0 + $0x168] sm:$0xff]
  %v64 = vld [vmem:[%s0 + $0x170] sm:$0xff]
  %v65 = vld [vmem:[%s0 + $0x178] sm:$0xff]
  %v66 = vld [vmem:[%s0 + $0x180] sm:$0xff]
  %v67 = vld [vmem:[%s0 + $0x188] sm:$0xff]
  %v68 = vld [vmem:[%s0 + $0x190] sm:$0xff]
  %v69 = vld [vmem:[%s0 + $0x198] sm:$0xff]
  %v70 = vld [vmem:[%s0 + $0x1a0] sm:$0xff]
  %v71 = vld [vmem:[%s0 + $0x1a8] sm:$0xff]
  %v72 = vld [vmem:[%s0 + $0x1b0] sm:$0xff]
  %v73 = vld [vmem:[%s0 + $0x1b8] sm:$0xff]
  %v74 = vld [vmem:[%s0 + $0x1c0] sm:$0xff]
  %v75 = vld [vmem:[%s0 + $0x1c8] sm:$0xff]
  %v76 = vld [vmem:[%s0 + $0x1d0] sm:$0xff]
  %v77 = vld [vmem:[%s0 + $0x1d8] sm:$0xff]
  %v78 = vld [vmem:[%s0 + $0x1e0] sm:$0xff]
  %v79 = vld [vmem:[%s0 + $0x1e8] sm:$0xff]
  %v80 = vld [vmem:[%s0 + $0x1f0] sm:$0xff]
  %v81 = vld [vmem:[%s0 + $0x1f8] sm:$0xff]
  %v82 = vmul.f32 %v18, %v18
  %v83 = vmul.f32 %v19, %v19
  %v84 = vmul.f32 %v20, %v20
  %v85 = vmul.f32 %v21, %v21
  %v86 = vmul.f32 %v22, %v22
  %v87 = vmul.f32 %v23, %v23
  %v88 = vmul.f32 %v24, %v24
  %v89 = vmul.f32 %v25, %v25
  %v90 = vmul.f32 %v26, %v26
  %v91 = vmul.f32 %v27, %v27
  %v92 = vmul.f32 %v28, %v28
  %v93 = vmul.f32 %v29, %v29
  %v94 = vmul.f32 %v30, %v30
  %v95 = vmul.f32 %v31, %v31
  %v96 = vmul.f32 %v32, %v32
  %v97 = vmul.f32 %v33, %v33
  %v98 = vmul.f32 %v34, %v34
  %v99 = vmul.f32 %v35, %v35
  %v100 = vmul.f32 %v36, %v36
  %v101 = vmul.f32 %v37, %v37
  %v102 = vmul.f32 %v38, %v38
  %v103 = vmul.f32 %v39, %v39
  %v104 = vmul.f32 %v40, %v40
  %v105 = vmul.f32 %v41, %v41
  %v106 = vmul.f32 %v42, %v42
  %v107 = vmul.f32 %v43, %v43
  %v108 = vmul.f32 %v44, %v44
  %v109 = vmul.f32 %v45, %v45
  %v110 = vmul.f32 %v46, %v46
  %v111 = vmul.f32 %v47, %v47
  %v112 = vmul.f32 %v48, %v48
  %v113 = vmul.f32 %v49, %v49
  %v114 = vmul.f32 %v50, %v50
  %v115 = vmul.f32 %v51, %v51
  %v116 = vmul.f32 %v52, %v52
  %v117 = vmul.f32 %v53, %v53
  %v118 = vmul.f32 %v54, %v54
  %v119 = vmul.f32 %v55, %v55
  %v120 = vmul.f32 %v56, %v56
  %v121 = vmul.f32 %v57, %v57
  %v122 = vmul.f32 %v58, %v58
  %v123 = vmul.f32 %v59, %v59
  %v124 = vmul.f32 %v60, %v60
  %v125 = vmul.f32 %v61, %v61
  %v126 = vmul.f32 %v62, %v62
  %v127 = vmul.f32 %v63, %v63
  %v128 = vmul.f32 %v64, %v64
  %v129 = vmul.f32 %v65, %v65
  %v130 = vmul.f32 %v66, %v66
  %v131 = vmul.f32 %v67, %v67
  %v132 = vmul.f32 %v68, %v68
  %v133 = vmul.f32 %v69, %v69
  %v134 = vmul.f32 %v70, %v70
  %v135 = vmul.f32 %v71, %v71
  %v136 = vmul.f32 %v72, %v72
  %v137 = vmul.f32 %v73, %v73
  %v138 = vmul.f32 %v74, %v74
  %v139 = vmul.f32 %v75, %v75
  %v140 = vmul.f32 %v76, %v76
  %v141 = vmul.f32 %v77, %v77
  %v142 = vmul.f32 %v78, %v78
  %v143 = vmul.f32 %v79, %v79
  %v144 = vmul.f32 %v80, %v80
  %v145 = vmul.f32 %v81, %v81
  %v146 = vadd.f32 %v82, %v83
  %147 = vadd.xlane.f32.xlu0 %v146
  %v148 = vpop.xlane.xlu0 %147
  %v149 = vadd.f32 %v84, %v85
  %150 = vadd.xlane.f32.xlu0 %v149
  %v151 = vpop.xlane.xlu0 %150
  %v152 = vadd.f32 %v86, %v87
  %153 = vadd.xlane.f32.xlu0 %v152
  %v154 = vpop.xlane.xlu0 %153
  %v155 = vadd.f32 %v88, %v89
  %156 = vadd.xlane.f32.xlu0 %v155
  %v157 = vpop.xlane.xlu0 %156
  %v158 = vadd.f32 %v90, %v91
  %159 = vadd.xlane.f32.xlu0 %v158
  %v160 = vpop.xlane.xlu0 %159
  %v161 = vadd.f32 %v92, %v93
  %162 = vadd.xlane.f32.xlu0 %v161
  %v163 = vpop.xlane.xlu0 %162
  %v164 = vadd.f32 %v94, %v95
  %165 = vadd.xlane.f32.xlu0 %v164
  %v166 = vpop.xlane.xlu0 %165
  %v167 = vadd.f32 %v96, %v97
  %168 = vadd.xlane.f32.xlu0 %v167
  %v169 = vpop.xlane.xlu0 %168
  %v170 = vadd.f32 %v98, %v99
  %171 = vadd.xlane.f32.xlu0 %v170
  %v172 = vpop.xlane.xlu0 %171
  %v173 = vadd.f32 %v100, %v101
  %174 = vadd.xlane.f32.xlu0 %v173
  %v175 = vpop.xlane.xlu0 %174
  %v176 = vadd.f32 %v102, %v103
  %177 = vadd.xlane.f32.xlu0 %v176
  %v178 = vpop.xlane.xlu0 %177
  %v179 = vadd.f32 %v104, %v105
  %180 = vadd.xlane.f32.xlu0 %v179
  %v181 = vpop.xlane.xlu0 %180
  %v182 = vadd.f32 %v106, %v107
  %183 = vadd.xlane.f32.xlu0 %v182
  %v184 = vpop.xlane.xlu0 %183
  %v185 = vadd.f32 %v108, %v109
  %186 = vadd.xlane.f32.xlu0 %v185
  %v187 = vpop.xlane.xlu0 %186
  %v188 = vadd.f32 %v110, %v111
  %189 = vadd.xlane.f32.xlu0 %v188
  %v190 = vpop.xlane.xlu0 %189
  %v191 = vadd.f32 %v112, %v113
  %192 = vadd.xlane.f32.xlu0 %v191
  %v193 = vpop.xlane.xlu0 %192
  %v194 = vadd.f32 %v114, %v115
  %195 = vadd.xlane.f32.xlu0 %v194
  %v196 = vpop.xlane.xlu0 %195
  %v197 = vadd.f32 %v116, %v117
  %198 = vadd.xlane.f32.xlu0 %v197
  %v199 = vpop.xlane.xlu0 %198
  %v200 = vadd.f32 %v118, %v119
  %201 = vadd.xlane.f32.xlu0 %v200
  %v202 = vpop.xlane.xlu0 %201
  %v203 = vadd.f32 %v120, %v121
  %204 = vadd.xlane.f32.xlu0 %v203
  %v205 = vpop.xlane.xlu0 %204
  %v206 = vadd.f32 %v122, %v123
  %207 = vadd.xlane.f32.xlu0 %v206
  %v208 = vpop.xlane.xlu0 %207
  %v209 = vadd.f32 %v124, %v125
  %210 = vadd.xlane.f32.xlu0 %v209
  %v211 = vpop.xlane.xlu0 %210
  %v212 = vadd.f32 %v126, %v127
  %213 = vadd.xlane.f32.xlu0 %v212
  %v214 = vpop.xlane.xlu0 %213
  %v215 = vadd.f32 %v128, %v129
  %216 = vadd.xlane.f32.xlu0 %v215
  %v217 = vpop.xlane.xlu0 %216
  %v218 = vadd.f32 %v130, %v131
  %219 = vadd.xlane.f32.xlu0 %v218
  %v220 = vpop.xlane.xlu0 %219
  %v221 = vadd.f32 %v132, %v133
  %222 = vadd.xlane.f32.xlu0 %v221
  %v223 = vpop.xlane.xlu0 %222
  %v224 = vadd.f32 %v134, %v135
  %225 = vadd.xlane.f32.xlu0 %v224
  %v226 = vpop.xlane.xlu0 %225
  %v227 = vadd.f32 %v136, %v137
  %228 = vadd.xlane.f32.xlu0 %v227
  %v229 = vpop.xlane.xlu0 %228
  %v230 = vadd.f32 %v138, %v139
  %231 = vadd.xlane.f32.xlu0 %v230
  %v232 = vpop.xlane.xlu0 %231
  %v233 = vadd.f32 %v140, %v141
  %234 = vadd.xlane.f32.xlu0 %v233
  %v235 = vpop.xlane.xlu0 %234
  %v236 = vadd.f32 %v142, %v143
  %237 = vadd.xlane.f32.xlu0 %v236
  %v238 = vpop.xlane.xlu0 %237
  %v239 = vadd.f32 %v144, %v145
  %240 = vadd.xlane.f32.xlu0 %v239
  %v241 = vpop.xlane.xlu0 %240
  %v242 = vmul.f32 %v148, 0.00390625
  %v243 = vmul.f32 %v151, 0.00390625
  %v244 = vmul.f32 %v154, 0.00390625
  %v245 = vmul.f32 %v157, 0.00390625
  %v246 = vmul.f32 %v160, 0.00390625
  %v247 = vmul.f32 %v163, 0.00390625
  %v248 = vmul.f32 %v166, 0.00390625
  %v249 = vmul.f32 %v169, 0.00390625
  %v250 = vmul.f32 %v172, 0.00390625
  %v251 = vmul.f32 %v175, 0.00390625
  %v252 = vmul.f32 %v178, 0.00390625
  %v253 = vmul.f32 %v181, 0.00390625
  %v254 = vmul.f32 %v184, 0.00390625
  %v255 = vmul.f32 %v187, 0.00390625
  %v256 = vmul.f32 %v190, 0.00390625
  %v257 = vmul.f32 %v193, 0.00390625
  %v258 = vmul.f32 %v196, 0.00390625
  %v259 = vmul.f32 %v199, 0.00390625
  %v260 = vmul.f32 %v202, 0.00390625
  %v261 = vmul.f32 %v205, 0.00390625
  %v262 = vmul.f32 %v208, 0.00390625
  %v263 = vmul.f32 %v211, 0.00390625
  %v264 = vmul.f32 %v214, 0.00390625
  %v265 = vmul.f32 %v217, 0.00390625
  %v266 = vmul.f32 %v220, 0.00390625
  %v267 = vmul.f32 %v223, 0.00390625
  %v268 = vmul.f32 %v226, 0.00390625
  %v269 = vmul.f32 %v229, 0.00390625
  %v270 = vmul.f32 %v232, 0.00390625
  %v271 = vmul.f32 %v235, 0.00390625
  %v272 = vmul.f32 %v238, 0.00390625
  %v273 = vmul.f32 %v241, 0.00390625
  %v274 = vadd.f32 %v242, 1e-08
  %v275 = vadd.f32 %v243, 1e-08
  %v276 = vadd.f32 %v244, 1e-08
  %v277 = vadd.f32 %v245, 1e-08
  %v278 = vadd.f32 %v246, 1e-08
  %v279 = vadd.f32 %v247, 1e-08
  %v280 = vadd.f32 %v248, 1e-08
  %v281 = vadd.f32 %v249, 1e-08
  %v282 = vadd.f32 %v250, 1e-08
  %v283 = vadd.f32 %v251, 1e-08
  %v284 = vadd.f32 %v252, 1e-08
  %v285 = vadd.f32 %v253, 1e-08
  %v286 = vadd.f32 %v254, 1e-08
  %v287 = vadd.f32 %v255, 1e-08
  %v288 = vadd.f32 %v256, 1e-08
  %v289 = vadd.f32 %v257, 1e-08
  %v290 = vadd.f32 %v258, 1e-08
  %v291 = vadd.f32 %v259, 1e-08
  %v292 = vadd.f32 %v260, 1e-08
  %v293 = vadd.f32 %v261, 1e-08
  %v294 = vadd.f32 %v262, 1e-08
  %v295 = vadd.f32 %v263, 1e-08
  %v296 = vadd.f32 %v264, 1e-08
  %v297 = vadd.f32 %v265, 1e-08
  %v298 = vadd.f32 %v266, 1e-08
  %v299 = vadd.f32 %v267, 1e-08
  %v300 = vadd.f32 %v268, 1e-08
  %v301 = vadd.f32 %v269, 1e-08
  %v302 = vadd.f32 %v270, 1e-08
  %v303 = vadd.f32 %v271, 1e-08
  %v304 = vadd.f32 %v272, 1e-08
  %v305 = vadd.f32 %v273, 1e-08
  %v306 = vrsqrt.pop %v274
  %v307 = vrsqrt.pop %v275
  %v308 = vrsqrt.pop %v276
  %v309 = vrsqrt.pop %v277
  %v310 = vrsqrt.pop %v278
  %v311 = vrsqrt.pop %v279
  %v312 = vrsqrt.pop %v280
  %v313 = vrsqrt.pop %v281
  %v314 = vrsqrt.pop %v282
  %v315 = vrsqrt.pop %v283
  %v316 = vrsqrt.pop %v284
  %v317 = vrsqrt.pop %v285
  %v318 = vrsqrt.pop %v286
  %v319 = vrsqrt.pop %v287
  %v320 = vrsqrt.pop %v288
  %v321 = vrsqrt.pop %v289
  %v322 = vrsqrt.pop %v290
  %v323 = vrsqrt.pop %v291
  %v324 = vrsqrt.pop %v292
  %v325 = vrsqrt.pop %v293
  %v326 = vrsqrt.pop %v294
  %v327 = vrsqrt.pop %v295
  %v328 = vrsqrt.pop %v296
  %v329 = vrsqrt.pop %v297
  %v330 = vrsqrt.pop %v298
  %v331 = vrsqrt.pop %v299
  %v332 = vrsqrt.pop %v300
  %v333 = vrsqrt.pop %v301
  %v334 = vrsqrt.pop %v302
  %v335 = vrsqrt.pop %v303
  %v336 = vrsqrt.pop %v304
  %v337 = vrsqrt.pop %v305
  %v338 = vmul.f32 %v18, %v306
  %v339 = vmul.f32 %v19, %v306
  %v340 = vmul.f32 %v20, %v307
  %v341 = vmul.f32 %v21, %v307
  %v342 = vmul.f32 %v22, %v308
  %v343 = vmul.f32 %v23, %v308
  %v344 = vmul.f32 %v24, %v309
  %v345 = vmul.f32 %v25, %v309
  %v346 = vmul.f32 %v26, %v310
  %v347 = vmul.f32 %v27, %v310
  %v348 = vmul.f32 %v28, %v311
  %v349 = vmul.f32 %v29, %v311
  %v350 = vmul.f32 %v30, %v312
  %v351 = vmul.f32 %v31, %v312
  %v352 = vmul.f32 %v32, %v313
  %v353 = vmul.f32 %v33, %v313
  %v354 = vmul.f32 %v34, %v314
  %v355 = vmul.f32 %v35, %v314
  %v356 = vmul.f32 %v36, %v315
  %v357 = vmul.f32 %v37, %v315
  %v358 = vmul.f32 %v38, %v316
  %v359 = vmul.f32 %v39, %v316
  %v360 = vmul.f32 %v40, %v317
  %v361 = vmul.f32 %v41, %v317
  %v362 = vmul.f32 %v42, %v318
  %v363 = vmul.f32 %v43, %v318
  %v364 = vmul.f32 %v44, %v319
  %v365 = vmul.f32 %v45, %v319
  %v366 = vmul.f32 %v46, %v320
  %v367 = vmul.f32 %v47, %v320
  %v368 = vmul.f32 %v48, %v321
  %v369 = vmul.f32 %v49, %v321
  %v370 = vmul.f32 %v50, %v322
  %v371 = vmul.f32 %v51, %v322
  %v372 = vmul.f32 %v52, %v323
  %v373 = vmul.f32 %v53, %v323
  %v374 = vmul.f32 %v54, %v324
  %v375 = vmul.f32 %v55, %v324
  %v376 = vmul.f32 %v56, %v325
  %v377 = vmul.f32 %v57, %v325
  %v378 = vmul.f32 %v58, %v326
  %v379 = vmul.f32 %v59, %v326
  %v380 = vmul.f32 %v60, %v327
  %v381 = vmul.f32 %v61, %v327
  %v382 = vmul.f32 %v62, %v328
  %v383 = vmul.f32 %v63, %v328
  %v384 = vmul.f32 %v64, %v329
  %v385 = vmul.f32 %v65, %v329
  %v386 = vmul.f32 %v66, %v330
  %v387 = vmul.f32 %v67, %v330
  %v388 = vmul.f32 %v68, %v331
  %v389 = vmul.f32 %v69, %v331
  %v390 = vmul.f32 %v70, %v332
  %v391 = vmul.f32 %v71, %v332
  %v392 = vmul.f32 %v72, %v333
  %v393 = vmul.f32 %v73, %v333
  %v394 = vmul.f32 %v74, %v334
  %v395 = vmul.f32 %v75, %v334
  %v396 = vmul.f32 %v76, %v335
  %v397 = vmul.f32 %v77, %v335
  %v398 = vmul.f32 %v78, %v336
  %v399 = vmul.f32 %v79, %v336
  %v400 = vmul.f32 %v80, %v337
  %v401 = vmul.f32 %v81, %v337
  %v402 = vpack.c.bf16 %v340, %v338
  %v403 = vpack.c.bf16 %v341, %v339
  %v404 = vpack.c.bf16 %v344, %v342
  %v405 = vpack.c.bf16 %v345, %v343
  %v406 = vpack.c.bf16 %v348, %v346
  %v407 = vpack.c.bf16 %v349, %v347
  %v408 = vpack.c.bf16 %v352, %v350
  %v409 = vpack.c.bf16 %v353, %v351
  %v410 = vpack.c.bf16 %v356, %v354
  %v411 = vpack.c.bf16 %v357, %v355
  %v412 = vpack.c.bf16 %v360, %v358
  %v413 = vpack.c.bf16 %v361, %v359
  %v414 = vpack.c.bf16 %v364, %v362
  %v415 = vpack.c.bf16 %v365, %v363
  %v416 = vpack.c.bf16 %v368, %v366
  %v417 = vpack.c.bf16 %v369, %v367
  %v418 = vpack.c.bf16 %v372, %v370
  %v419 = vpack.c.bf16 %v373, %v371
  %v420 = vpack.c.bf16 %v376, %v374
  %v421 = vpack.c.bf16 %v377, %v375
  %v422 = vpack.c.bf16 %v380, %v378
  %v423 = vpack.c.bf16 %v381, %v379
  %v424 = vpack.c.bf16 %v384, %v382
  %v425 = vpack.c.bf16 %v385, %v383
  %v426 = vpack.c.bf16 %v388, %v386
  %v427 = vpack.c.bf16 %v389, %v387
  %v428 = vpack.c.bf16 %v392, %v390
  %v429 = vpack.c.bf16 %v393, %v391
  %v430 = vpack.c.bf16 %v396, %v394
  %v431 = vpack.c.bf16 %v397, %v395
  %v432 = vpack.c.bf16 %v400, %v398
  %v433 = vpack.c.bf16 %v401, %v399
  %v434 = vld [vmem:[%s1] sm:$0xf]
  %v435 = vld [vmem:[%s1 + $0x4] sm:$0xf]
  %v436 = vld [vmem:[%s1 + $0x8] sm:$0xf]
  %v437 = vld [vmem:[%s1 + $0xc] sm:$0xf]
  %v438 = vld [vmem:[%s1 + $0x10] sm:$0xf]
  %v439 = vld [vmem:[%s1 + $0x14] sm:$0xf]
  %v440 = vld [vmem:[%s1 + $0x18] sm:$0xf]
  %v441 = vld [vmem:[%s1 + $0x1c] sm:$0xf]
  %v442 = vld [vmem:[%s1 + $0x20] sm:$0xf]
  %v443 = vld [vmem:[%s1 + $0x24] sm:$0xf]
  %v444 = vld [vmem:[%s1 + $0x28] sm:$0xf]
  %v445 = vld [vmem:[%s1 + $0x2c] sm:$0xf]
  %v446 = vld [vmem:[%s1 + $0x30] sm:$0xf]
  %v447 = vld [vmem:[%s1 + $0x34] sm:$0xf]
  %v448 = vld [vmem:[%s1 + $0x38] sm:$0xf]
  %v449 = vld [vmem:[%s1 + $0x3c] sm:$0xf]
  %v450 = vld [vmem:[%s1 + $0x40] sm:$0xf]
  %v451 = vld [vmem:[%s1 + $0x44] sm:$0xf]
  %v452 = vld [vmem:[%s1 + $0x48] sm:$0xf]
  %v453 = vld [vmem:[%s1 + $0x4c] sm:$0xf]
  %v454 = vld [vmem:[%s1 + $0x50] sm:$0xf]
  %v455 = vld [vmem:[%s1 + $0x54] sm:$0xf]
  %v456 = vld [vmem:[%s1 + $0x58] sm:$0xf]
  %v457 = vld [vmem:[%s1 + $0x5c] sm:$0xf]
  %v458 = vld [vmem:[%s1 + $0x60] sm:$0xf]
  %v459 = vld [vmem:[%s1 + $0x64] sm:$0xf]
  %v460 = vld [vmem:[%s1 + $0x68] sm:$0xf]
  %v461 = vld [vmem:[%s1 + $0x6c] sm:$0xf]
  %v462 = vld [vmem:[%s1 + $0x70] sm:$0xf]
  %v463 = vld [vmem:[%s1 + $0x74] sm:$0xf]
  %v464 = vld [vmem:[%s1 + $0x78] sm:$0xf]
  %v465 = vld [vmem:[%s1 + $0x7c] sm:$0xf]
  %v466 = vld [vmem:[%s3] sm:$0x1]
  %v467 = vlaneseq
  %v468 = vshrl.u32 %v467, 7
  %v469 = vsub.s32 0, %v468
  %v470 = vrot.slane %v466, %v469
  %v503 = vunpack.c.l.b16 %v434
  %v504 = vunpack.c.l.b16 %v435
  %v505 = vunpack.c.l.b16 %v436
  %v506 = vunpack.c.l.b16 %v437
  %v507 = vunpack.c.l.b16 %v438
  %v508 = vunpack.c.l.b16 %v439
  %v509 = vunpack.c.l.b16 %v440
  %v510 = vunpack.c.l.b16 %v441
  %v511 = vunpack.c.l.b16 %v442
  %v512 = vunpack.c.l.b16 %v443
  %v513 = vunpack.c.l.b16 %v444
  %v514 = vunpack.c.l.b16 %v445
  %v515 = vunpack.c.l.b16 %v446
  %v516 = vunpack.c.l.b16 %v447
  %v517 = vunpack.c.l.b16 %v448
  %v518 = vunpack.c.l.b16 %v449
  %v519 = vunpack.c.l.b16 %v450
  %v520 = vunpack.c.l.b16 %v451
  %v521 = vunpack.c.l.b16 %v452
  %v522 = vunpack.c.l.b16 %v453
  %v523 = vunpack.c.l.b16 %v454
  %v524 = vunpack.c.l.b16 %v455
  %v525 = vunpack.c.l.b16 %v456
  %v526 = vunpack.c.l.b16 %v457
  %v527 = vunpack.c.l.b16 %v458
  %v528 = vunpack.c.l.b16 %v459
  %v529 = vunpack.c.l.b16 %v460
  %v530 = vunpack.c.l.b16 %v461
  %v531 = vunpack.c.l.b16 %v462
  %v532 = vunpack.c.l.b16 %v463
  %v533 = vunpack.c.l.b16 %v464
  %v534 = vunpack.c.l.b16 %v465
  %v535 = vpack.c.b16 %v504, %v503
  %v536 = vpack.c.b16 %v506, %v505
  %v537 = vpack.c.b16 %v508, %v507
  %v538 = vpack.c.b16 %v510, %v509
  %v539 = vpack.c.b16 %v512, %v511
  %v540 = vpack.c.b16 %v514, %v513
  %v541 = vpack.c.b16 %v516, %v515
  %v542 = vpack.c.b16 %v518, %v517
  %v543 = vpack.c.b16 %v520, %v519
  %v544 = vpack.c.b16 %v522, %v521
  %v545 = vpack.c.b16 %v524, %v523
  %v546 = vpack.c.b16 %v526, %v525
  %v547 = vpack.c.b16 %v528, %v527
  %v548 = vpack.c.b16 %v530, %v529
  %v549 = vpack.c.b16 %v532, %v531
  %v550 = vpack.c.b16 %v534, %v533
  %567 = vmatprep.subr.bf16.mxu0 0
  %568 = vmatpush1.bf16.msra.mxu0 %v542
  %569 = vmatprep.subr.bf16.mxu0 0
  %570 = vmatpush1.bf16.msra.mxu0 %v541
  %571 = vmatprep.subr.bf16.mxu0 0
  %572 = vmatpush1.bf16.msra.mxu0 %v540
  %573 = vmatprep.subr.bf16.mxu0 0
  %574 = vmatpush1.bf16.msra.mxu0 %v539
  %575 = vmatprep.subr.bf16.mxu0 0
  %576 = vmatpush1.bf16.msra.mxu0 %v538
  %577 = vmatprep.subr.bf16.mxu0 0
  %578 = vmatpush1.bf16.msra.mxu0 %v537
  %579 = vmatprep.subr.bf16.mxu0 0
  %580 = vmatpush1.bf16.msra.mxu0 %v536
  %581 = vmatprep.subr.bf16.mxu0 0
  %582 = vmatpush1.bf16.msra.mxu0 %v535
  %583 = vmatprep.subr.bf16.mxu0 0
  %584 = vmatpush2.bf16.msra.mxu0 %v550
  %585 = vmatprep.subr.bf16.mxu0 0
  %586 = vmatpush2.bf16.msra.mxu0 %v549
  %587 = vmatprep.subr.bf16.mxu0 0
  %588 = vmatpush2.bf16.msra.mxu0 %v548
  %589 = vmatprep.subr.bf16.mxu0 0
  %590 = vmatpush2.bf16.msra.mxu0 %v547
  %591 = vmatprep.subr.bf16.mxu0 0
  %592 = vmatpush2.bf16.msra.mxu0 %v546
  %593 = vmatprep.subr.bf16.mxu0 0
  %594 = vmatpush2.bf16.msra.mxu0 %v545
  %595 = vmatprep.subr.bf16.mxu0 0
  %596 = vmatpush2.bf16.msra.mxu0 %v544
  %597 = vmatprep.subr.bf16.mxu0 0
  %598 = vmatpush2.bf16.msra.mxu0 %v543
  %599 = vmatprep.mubr.bf16.mxu0 %v403
  %600 = vmatmul.mubr.bf16.gmra.mxu0 %v402
  %v601 = vpop.f32.mrf.mxu0
  %v602 = vadd.f32 %v470, %v601
  %v603 = vpop.f32.mrf.mxu0
  %v604 = vpop.f32.mrf.mxu0
  %v605 = vadd.f32 %v470, %v604
  %v606 = vpop.f32.mrf.mxu0
  %607 = vmatprep.mubr.bf16.mxu0 %v405
  %608 = vmatmul.mubr.bf16.gmra.mxu0 %v404
  %v609 = vpop.f32.mrf.mxu0
  %v610 = vadd.f32 %v470, %v609
  %v611 = vpop.f32.mrf.mxu0
  %v612 = vpop.f32.mrf.mxu0
  %v613 = vadd.f32 %v470, %v612
  %v614 = vpop.f32.mrf.mxu0
  %615 = vmatprep.mubr.bf16.mxu0 %v407
  %616 = vmatmul.mubr.bf16.gmra.mxu0 %v406
  %v617 = vpop.f32.mrf.mxu0
  %v618 = vadd.f32 %v470, %v617
  %v619 = vpop.f32.mrf.mxu0
  %v620 = vpop.f32.mrf.mxu0
  %v621 = vadd.f32 %v470, %v620
  %v622 = vpop.f32.mrf.mxu0
  %623 = vmatprep.mubr.bf16.mxu0 %v409
  %624 = vmatmul.mubr.bf16.gmra.mxu0 %v408
  %v625 = vpop.f32.mrf.mxu0
  %v626 = vadd.f32 %v470, %v625
  %v627 = vpop.f32.mrf.mxu0
  %v628 = vpop.f32.mrf.mxu0
  %v629 = vadd.f32 %v470, %v628
  %v630 = vpop.f32.mrf.mxu0
  %631 = vmatprep.mubr.bf16.mxu0 %v411
  %632 = vmatmul.mubr.bf16.gmra.mxu0 %v410
  %v633 = vpop.f32.mrf.mxu0
  %v634 = vadd.f32 %v470, %v633
  %v635 = vpop.f32.mrf.mxu0
  %v636 = vpop.f32.mrf.mxu0
  %v637 = vadd.f32 %v470, %v636
  %v638 = vpop.f32.mrf.mxu0
  %639 = vmatprep.mubr.bf16.mxu0 %v413
  %640 = vmatmul.mubr.bf16.gmra.mxu0 %v412
  %v641 = vpop.f32.mrf.mxu0
  %v642 = vadd.f32 %v470, %v641
  %v643 = vpop.f32.mrf.mxu0
  %v644 = vpop.f32.mrf.mxu0
  %v645 = vadd.f32 %v470, %v644
  %v646 = vpop.f32.mrf.mxu0
  %647 = vmatprep.mubr.bf16.mxu0 %v415
  %648 = vmatmul.mubr.bf16.gmra.mxu0 %v414
  %v649 = vpop.f32.mrf.mxu0
  %v650 = vadd.f32 %v470, %v649
  %v651 = vpop.f32.mrf.mxu0
  %v652 = vpop.f32.mrf.mxu0
  %v653 = vadd.f32 %v470, %v652
  %v654 = vpop.f32.mrf.mxu0
  %655 = vmatprep.mubr.bf16.mxu0 %v417
  %656 = vmatmul.mubr.bf16.gmra.mxu0 %v416
  %v657 = vpop.f32.mrf.mxu0
  %v658 = vadd.f32 %v470, %v657
  %v659 = vpop.f32.mrf.mxu0
  %v660 = vpop.f32.mrf.mxu0
  %v661 = vadd.f32 %v470, %v660
  %v662 = vpop.f32.mrf.mxu0
  %663 = vmatprep.mubr.bf16.mxu0 %v419
  %664 = vmatmul.mubr.bf16.gmra.mxu0 %v418
  %v665 = vpop.f32.mrf.mxu0
  %v666 = vadd.f32 %v470, %v665
  %v667 = vpop.f32.mrf.mxu0
  %v668 = vpop.f32.mrf.mxu0
  %v669 = vadd.f32 %v470, %v668
  %v670 = vpop.f32.mrf.mxu0
  %671 = vmatprep.mubr.bf16.mxu0 %v421
  %672 = vmatmul.mubr.bf16.gmra.mxu0 %v420
  %v673 = vpop.f32.mrf.mxu0
  %v674 = vadd.f32 %v470, %v673
  %v675 = vpop.f32.mrf.mxu0
  %v676 = vpop.f32.mrf.mxu0
  %v677 = vadd.f32 %v470, %v676
  %v678 = vpop.f32.mrf.mxu0
  %679 = vmatprep.mubr.bf16.mxu0 %v423
  %680 = vmatmul.mubr.bf16.gmra.mxu0 %v422
  %v681 = vpop.f32.mrf.mxu0
  %v682 = vadd.f32 %v470, %v681
  %v683 = vpop.f32.mrf.mxu0
  %v684 = vpop.f32.mrf.mxu0
  %v685 = vadd.f32 %v470, %v684
  %v686 = vpop.f32.mrf.mxu0
  %687 = vmatprep.mubr.bf16.mxu0 %v425
  %688 = vmatmul.mubr.bf16.gmra.mxu0 %v424
  %v689 = vpop.f32.mrf.mxu0
  %v690 = vadd.f32 %v470, %v689
  %v691 = vpop.f32.mrf.mxu0
  %v692 = vpop.f32.mrf.mxu0
  %v693 = vadd.f32 %v470, %v692
  %v694 = vpop.f32.mrf.mxu0
  %695 = vmatprep.mubr.bf16.mxu0 %v427
  %696 = vmatmul.mubr.bf16.gmra.mxu0 %v426
  %v697 = vpop.f32.mrf.mxu0
  %v698 = vadd.f32 %v470, %v697
  %v699 = vpop.f32.mrf.mxu0
  %v700 = vpop.f32.mrf.mxu0
  %v701 = vadd.f32 %v470, %v700
  %v702 = vpop.f32.mrf.mxu0
  %703 = vmatprep.mubr.bf16.mxu0 %v429
  %704 = vmatmul.mubr.bf16.gmra.mxu0 %v428
  %v705 = vpop.f32.mrf.mxu0
  %v706 = vadd.f32 %v470, %v705
  %v707 = vpop.f32.mrf.mxu0
  %v708 = vpop.f32.mrf.mxu0
  %v709 = vadd.f32 %v470, %v708
  %v710 = vpop.f32.mrf.mxu0
  %711 = vmatprep.mubr.bf16.mxu0 %v431
  %712 = vmatmul.mubr.bf16.gmra.mxu0 %v430
  %v713 = vpop.f32.mrf.mxu0
  %v714 = vadd.f32 %v470, %v713
  %v715 = vpop.f32.mrf.mxu0
  %v716 = vpop.f32.mrf.mxu0
  %v717 = vadd.f32 %v470, %v716
  %v718 = vpop.f32.mrf.mxu0
  %719 = vmatprep.mubr.bf16.mxu0 %v433
  %720 = vmatmul.mubr.bf16.gmra.mxu0 %v432
  %v721 = vpop.f32.mrf.mxu0
  %v722 = vadd.f32 %v470, %v721
  %v723 = vpop.f32.mrf.mxu0
  %v724 = vpop.f32.mrf.mxu0
  %v725 = vadd.f32 %v470, %v724
  %v726 = vpop.f32.mrf.mxu0
  %727 = vdwg.mxu0
  %v728 = vmul.f32 %v602, 0.2
  %v729 = vmul.f32 %v605, 0.2
  %v730 = vmul.f32 %v610, 0.2
  %v731 = vmul.f32 %v613, 0.2
  %v732 = vmul.f32 %v618, 0.2
  %v733 = vmul.f32 %v621, 0.2
  %v734 = vmul.f32 %v626, 0.2
  %v735 = vmul.f32 %v629, 0.2
  %v736 = vmul.f32 %v634, 0.2
  %v737 = vmul.f32 %v637, 0.2
  %v738 = vmul.f32 %v642, 0.2
  %v739 = vmul.f32 %v645, 0.2
  %v740 = vmul.f32 %v650, 0.2
  %v741 = vmul.f32 %v653, 0.2
  %v742 = vmul.f32 %v658, 0.2
  %v743 = vmul.f32 %v661, 0.2
  %v744 = vmul.f32 %v666, 0.2
  %v745 = vmul.f32 %v669, 0.2
  %v746 = vmul.f32 %v674, 0.2
  %v747 = vmul.f32 %v677, 0.2
  %v748 = vmul.f32 %v682, 0.2
  %v749 = vmul.f32 %v685, 0.2
  %v750 = vmul.f32 %v690, 0.2
  %v751 = vmul.f32 %v693, 0.2
  %v752 = vmul.f32 %v698, 0.2
  %v753 = vmul.f32 %v701, 0.2
  %v754 = vmul.f32 %v706, 0.2
  %v755 = vmul.f32 %v709, 0.2
  %v756 = vmul.f32 %v714, 0.2
  %v757 = vmul.f32 %v717, 0.2
  %v758 = vmul.f32 %v722, 0.2
  %v759 = vmul.f32 %v725, 0.2
  %v760 = vmax.f32 %v602, %v728
  %v761 = vmax.f32 %v605, %v729
  %v762 = vmax.f32 %v610, %v730
  %v763 = vmax.f32 %v613, %v731
  %v764 = vmax.f32 %v618, %v732
  %v765 = vmax.f32 %v621, %v733
  %v766 = vmax.f32 %v626, %v734
  %v767 = vmax.f32 %v629, %v735
  %v768 = vmax.f32 %v634, %v736
  %v769 = vmax.f32 %v637, %v737
  %v770 = vmax.f32 %v642, %v738
  %v771 = vmax.f32 %v645, %v739
  %v772 = vmax.f32 %v650, %v740
  %v773 = vmax.f32 %v653, %v741
  %v774 = vmax.f32 %v658, %v742
  %v775 = vmax.f32 %v661, %v743
  %v776 = vmax.f32 %v666, %v744
  %v777 = vmax.f32 %v669, %v745
  %v778 = vmax.f32 %v674, %v746
  %v779 = vmax.f32 %v677, %v747
  %v780 = vmax.f32 %v682, %v748
  %v781 = vmax.f32 %v685, %v749
  %v782 = vmax.f32 %v690, %v750
  %v783 = vmax.f32 %v693, %v751
  %v784 = vmax.f32 %v698, %v752
  %v785 = vmax.f32 %v701, %v753
  %v786 = vmax.f32 %v706, %v754
  %v787 = vmax.f32 %v709, %v755
  %v788 = vmax.f32 %v714, %v756
  %v789 = vmax.f32 %v717, %v757
  %v790 = vmax.f32 %v722, %v758
  %v791 = vmax.f32 %v725, %v759
  %v792 = vpack.c.bf16 %v761, %v760
  %v793 = vpack.c.bf16 %v763, %v762
  %v794 = vpack.c.bf16 %v765, %v764
  %v795 = vpack.c.bf16 %v767, %v766
  %v796 = vpack.c.bf16 %v769, %v768
  %v797 = vpack.c.bf16 %v771, %v770
  %v798 = vpack.c.bf16 %v773, %v772
  %v799 = vpack.c.bf16 %v775, %v774
  %v800 = vpack.c.bf16 %v777, %v776
  %v801 = vpack.c.bf16 %v779, %v778
  %v802 = vpack.c.bf16 %v781, %v780
  %v803 = vpack.c.bf16 %v783, %v782
  %v804 = vpack.c.bf16 %v785, %v784
  %v805 = vpack.c.bf16 %v787, %v786
  %v806 = vpack.c.bf16 %v789, %v788
  %v807 = vpack.c.bf16 %v791, %v790
  %v808 = vld [vmem:[%s2] sm:$0xf]
  %v809 = vld [vmem:[%s2 + $0x4] sm:$0xf]
  %v810 = vld [vmem:[%s2 + $0x8] sm:$0xf]
  %v811 = vld [vmem:[%s2 + $0xc] sm:$0xf]
  %v812 = vld [vmem:[%s2 + $0x10] sm:$0xf]
  %v813 = vld [vmem:[%s2 + $0x14] sm:$0xf]
  %v814 = vld [vmem:[%s2 + $0x18] sm:$0xf]
  %v815 = vld [vmem:[%s2 + $0x1c] sm:$0xf]
  %v816 = vld [vmem:[%s2 + $0x20] sm:$0xf]
  %v817 = vld [vmem:[%s2 + $0x24] sm:$0xf]
  %v818 = vld [vmem:[%s2 + $0x28] sm:$0xf]
  %v819 = vld [vmem:[%s2 + $0x2c] sm:$0xf]
  %v820 = vld [vmem:[%s2 + $0x30] sm:$0xf]
  %v821 = vld [vmem:[%s2 + $0x34] sm:$0xf]
  %v822 = vld [vmem:[%s2 + $0x38] sm:$0xf]
  %v823 = vld [vmem:[%s2 + $0x3c] sm:$0xf]
  %v824 = vld [vmem:[%s3 + $0x1] sm:$0x1]
  %v825 = vlaneseq
  %v826 = vshrl.u32 %v825, 7
  %v827 = vsub.s32 0, %v826
  %v828 = vrot.slane %v824, %v827
  %v845 = vunpack.c.l.b16 %v808
  %v846 = vunpack.c.l.b16 %v809
  %v847 = vunpack.c.l.b16 %v810
  %v848 = vunpack.c.l.b16 %v811
  %v849 = vunpack.c.l.b16 %v812
  %v850 = vunpack.c.l.b16 %v813
  %v851 = vunpack.c.l.b16 %v814
  %v852 = vunpack.c.l.b16 %v815
  %v853 = vunpack.c.l.b16 %v816
  %v854 = vunpack.c.l.b16 %v817
  %v855 = vunpack.c.l.b16 %v818
  %v856 = vunpack.c.l.b16 %v819
  %v857 = vunpack.c.l.b16 %v820
  %v858 = vunpack.c.l.b16 %v821
  %v859 = vunpack.c.l.b16 %v822
  %v860 = vunpack.c.l.b16 %v823
  %v861 = vpack.c.b16 %v846, %v845
  %v862 = vpack.c.b16 %v848, %v847
  %v863 = vpack.c.b16 %v850, %v849
  %v864 = vpack.c.b16 %v852, %v851
  %v865 = vpack.c.b16 %v854, %v853
  %v866 = vpack.c.b16 %v856, %v855
  %v867 = vpack.c.b16 %v858, %v857
  %v868 = vpack.c.b16 %v860, %v859
  %877 = vmatprep.subr.bf16.mxu0 0
  %878 = vmatpush1.bf16.msra.mxu0 %v868
  %879 = vmatprep.subr.bf16.mxu0 0
  %880 = vmatpush1.bf16.msra.mxu0 %v867
  %881 = vmatprep.subr.bf16.mxu0 0
  %882 = vmatpush1.bf16.msra.mxu0 %v866
  %883 = vmatprep.subr.bf16.mxu0 0
  %884 = vmatpush1.bf16.msra.mxu0 %v865
  %885 = vmatprep.subr.bf16.mxu0 0
  %886 = vmatpush1.bf16.msra.mxu0 %v864
  %887 = vmatprep.subr.bf16.mxu0 0
  %888 = vmatpush1.bf16.msra.mxu0 %v863
  %889 = vmatprep.subr.bf16.mxu0 0
  %890 = vmatpush1.bf16.msra.mxu0 %v862
  %891 = vmatprep.subr.bf16.mxu0 0
  %892 = vmatpush1.bf16.msra.mxu0 %v861
  %893 = vmatprep.subr.bf16.mxu0 0
  %894 = vmatpush2.bf16.msra.mxu0 0
  %895 = vmatprep.subr.bf16.mxu0 0
  %896 = vmatpush2.bf16.msra.mxu0 0
  %897 = vmatprep.subr.bf16.mxu0 0
  %898 = vmatpush2.bf16.msra.mxu0 0
  %899 = vmatprep.subr.bf16.mxu0 0
  %900 = vmatpush2.bf16.msra.mxu0 0
  %901 = vmatprep.subr.bf16.mxu0 0
  %902 = vmatpush2.bf16.msra.mxu0 0
  %903 = vmatprep.subr.bf16.mxu0 0
  %904 = vmatpush2.bf16.msra.mxu0 0
  %905 = vmatprep.subr.bf16.mxu0 0
  %906 = vmatpush2.bf16.msra.mxu0 0
  %907 = vmatprep.subr.bf16.mxu0 0
  %908 = vmatpush2.bf16.msra.mxu0 0
  %909 = vmatprep.mubr.bf16.mxu0 0
  %910 = vmatmul.mubr.bf16.gmra.mxu0 %v792
  %v911 = vpop.f32.mrf.mxu0
  %v912 = vadd.f32 %v828, %v911
  %v913 = vpop.f32.mrf.mxu0
  %v914 = vpop.f32.mrf.mxu0
  %v915 = vadd.f32 %v828, %v914
  %v916 = vpop.f32.mrf.mxu0
  %917 = vmatprep.mubr.bf16.mxu0 0
  %918 = vmatmul.mubr.bf16.gmra.mxu0 %v793
  %v919 = vpop.f32.mrf.mxu0
  %v920 = vadd.f32 %v828, %v919
  %v921 = vpop.f32.mrf.mxu0
  %v922 = vpop.f32.mrf.mxu0
  %v923 = vadd.f32 %v828, %v922
  %v924 = vpop.f32.mrf.mxu0
  %925 = vmatprep.mubr.bf16.mxu0 0
  %926 = vmatmul.mubr.bf16.gmra.mxu0 %v794
  %v927 = vpop.f32.mrf.mxu0
  %v928 = vadd.f32 %v828, %v927
  %v929 = vpop.f32.mrf.mxu0
  %v930 = vpop.f32.mrf.mxu0
  %v931 = vadd.f32 %v828, %v930
  %v932 = vpop.f32.mrf.mxu0
  %933 = vmatprep.mubr.bf16.mxu0 0
  %934 = vmatmul.mubr.bf16.gmra.mxu0 %v795
  %v935 = vpop.f32.mrf.mxu0
  %v936 = vadd.f32 %v828, %v935
  %v937 = vpop.f32.mrf.mxu0
  %v938 = vpop.f32.mrf.mxu0
  %v939 = vadd.f32 %v828, %v938
  %v940 = vpop.f32.mrf.mxu0
  %941 = vmatprep.mubr.bf16.mxu0 0
  %942 = vmatmul.mubr.bf16.gmra.mxu0 %v796
  %v943 = vpop.f32.mrf.mxu0
  %v944 = vadd.f32 %v828, %v943
  %v945 = vpop.f32.mrf.mxu0
  %v946 = vpop.f32.mrf.mxu0
  %v947 = vadd.f32 %v828, %v946
  %v948 = vpop.f32.mrf.mxu0
  %949 = vmatprep.mubr.bf16.mxu0 0
  %950 = vmatmul.mubr.bf16.gmra.mxu0 %v797
  %v951 = vpop.f32.mrf.mxu0
  %v952 = vadd.f32 %v828, %v951
  %v953 = vpop.f32.mrf.mxu0
  %v954 = vpop.f32.mrf.mxu0
  %v955 = vadd.f32 %v828, %v954
  %v956 = vpop.f32.mrf.mxu0
  %957 = vmatprep.mubr.bf16.mxu0 0
  %958 = vmatmul.mubr.bf16.gmra.mxu0 %v798
  %v959 = vpop.f32.mrf.mxu0
  %v960 = vadd.f32 %v828, %v959
  %v961 = vpop.f32.mrf.mxu0
  %v962 = vpop.f32.mrf.mxu0
  %v963 = vadd.f32 %v828, %v962
  %v964 = vpop.f32.mrf.mxu0
  %965 = vmatprep.mubr.bf16.mxu0 0
  %966 = vmatmul.mubr.bf16.gmra.mxu0 %v799
  %v967 = vpop.f32.mrf.mxu0
  %v968 = vadd.f32 %v828, %v967
  %v969 = vpop.f32.mrf.mxu0
  %v970 = vpop.f32.mrf.mxu0
  %v971 = vadd.f32 %v828, %v970
  %v972 = vpop.f32.mrf.mxu0
  %973 = vmatprep.mubr.bf16.mxu0 0
  %974 = vmatmul.mubr.bf16.gmra.mxu0 %v800
  %v975 = vpop.f32.mrf.mxu0
  %v976 = vadd.f32 %v828, %v975
  %v977 = vpop.f32.mrf.mxu0
  %v978 = vpop.f32.mrf.mxu0
  %v979 = vadd.f32 %v828, %v978
  %v980 = vpop.f32.mrf.mxu0
  %981 = vmatprep.mubr.bf16.mxu0 0
  %982 = vmatmul.mubr.bf16.gmra.mxu0 %v801
  %v983 = vpop.f32.mrf.mxu0
  %v984 = vadd.f32 %v828, %v983
  %v985 = vpop.f32.mrf.mxu0
  %v986 = vpop.f32.mrf.mxu0
  %v987 = vadd.f32 %v828, %v986
  %v988 = vpop.f32.mrf.mxu0
  %989 = vmatprep.mubr.bf16.mxu0 0
  %990 = vmatmul.mubr.bf16.gmra.mxu0 %v802
  %v991 = vpop.f32.mrf.mxu0
  %v992 = vadd.f32 %v828, %v991
  %v993 = vpop.f32.mrf.mxu0
  %v994 = vpop.f32.mrf.mxu0
  %v995 = vadd.f32 %v828, %v994
  %v996 = vpop.f32.mrf.mxu0
  %997 = vmatprep.mubr.bf16.mxu0 0
  %998 = vmatmul.mubr.bf16.gmra.mxu0 %v803
  %v999 = vpop.f32.mrf.mxu0
  %v1000 = vadd.f32 %v828, %v999
  %v1001 = vpop.f32.mrf.mxu0
  %v1002 = vpop.f32.mrf.mxu0
  %v1003 = vadd.f32 %v828, %v1002
  %v1004 = vpop.f32.mrf.mxu0
  %1005 = vmatprep.mubr.bf16.mxu0 0
  %1006 = vmatmul.mubr.bf16.gmra.mxu0 %v804
  %v1007 = vpop.f32.mrf.mxu0
  %v1008 = vadd.f32 %v828, %v1007
  %v1009 = vpop.f32.mrf.mxu0
  %v1010 = vpop.f32.mrf.mxu0
  %v1011 = vadd.f32 %v828, %v1010
  %v1012 = vpop.f32.mrf.mxu0
  %1013 = vmatprep.mubr.bf16.mxu0 0
  %1014 = vmatmul.mubr.bf16.gmra.mxu0 %v805
  %v1015 = vpop.f32.mrf.mxu0
  %v1016 = vadd.f32 %v828, %v1015
  %v1017 = vpop.f32.mrf.mxu0
  %v1018 = vpop.f32.mrf.mxu0
  %v1019 = vadd.f32 %v828, %v1018
  %v1020 = vpop.f32.mrf.mxu0
  %1021 = vmatprep.mubr.bf16.mxu0 0
  %1022 = vmatmul.mubr.bf16.gmra.mxu0 %v806
  %v1023 = vpop.f32.mrf.mxu0
  %v1024 = vadd.f32 %v828, %v1023
  %v1025 = vpop.f32.mrf.mxu0
  %v1026 = vpop.f32.mrf.mxu0
  %v1027 = vadd.f32 %v828, %v1026
  %v1028 = vpop.f32.mrf.mxu0
  %1029 = vmatprep.mubr.bf16.mxu0 0
  %1030 = vmatmul.mubr.bf16.gmra.mxu0 %v807
  %v1031 = vpop.f32.mrf.mxu0
  %v1032 = vadd.f32 %v828, %v1031
  %v1033 = vpop.f32.mrf.mxu0
  %v1034 = vpop.f32.mrf.mxu0
  %v1035 = vadd.f32 %v828, %v1034
  %v1036 = vpop.f32.mrf.mxu0
  %1037 = vdwg.mxu0
  %v1038 = vmul.f32 %v912, 0.2
  %v1039 = vmul.f32 %v915, 0.2
  %v1040 = vmul.f32 %v920, 0.2
  %v1041 = vmul.f32 %v923, 0.2
  %v1042 = vmul.f32 %v928, 0.2
  %v1043 = vmul.f32 %v931, 0.2
  %v1044 = vmul.f32 %v936, 0.2
  %v1045 = vmul.f32 %v939, 0.2
  %v1046 = vmul.f32 %v944, 0.2
  %v1047 = vmul.f32 %v947, 0.2
  %v1048 = vmul.f32 %v952, 0.2
  %v1049 = vmul.f32 %v955, 0.2
  %v1050 = vmul.f32 %v960, 0.2
  %v1051 = vmul.f32 %v963, 0.2
  %v1052 = vmul.f32 %v968, 0.2
  %v1053 = vmul.f32 %v971, 0.2
  %v1054 = vmul.f32 %v976, 0.2
  %v1055 = vmul.f32 %v979, 0.2
  %v1056 = vmul.f32 %v984, 0.2
  %v1057 = vmul.f32 %v987, 0.2
  %v1058 = vmul.f32 %v992, 0.2
  %v1059 = vmul.f32 %v995, 0.2
  %v1060 = vmul.f32 %v1000, 0.2
  %v1061 = vmul.f32 %v1003, 0.2
  %v1062 = vmul.f32 %v1008, 0.2
  %v1063 = vmul.f32 %v1011, 0.2
  %v1064 = vmul.f32 %v1016, 0.2
  %v1065 = vmul.f32 %v1019, 0.2
  %v1066 = vmul.f32 %v1024, 0.2
  %v1067 = vmul.f32 %v1027, 0.2
  %v1068 = vmul.f32 %v1032, 0.2
  %v1069 = vmul.f32 %v1035, 0.2
  %v1070 = vmax.f32 %v912, %v1038
  %v1071 = vmax.f32 %v915, %v1039
  %v1072 = vmax.f32 %v920, %v1040
  %v1073 = vmax.f32 %v923, %v1041
  %v1074 = vmax.f32 %v928, %v1042
  %v1075 = vmax.f32 %v931, %v1043
  %v1076 = vmax.f32 %v936, %v1044
  %v1077 = vmax.f32 %v939, %v1045
  %v1078 = vmax.f32 %v944, %v1046
  %v1079 = vmax.f32 %v947, %v1047
  %v1080 = vmax.f32 %v952, %v1048
  %v1081 = vmax.f32 %v955, %v1049
  %v1082 = vmax.f32 %v960, %v1050
  %v1083 = vmax.f32 %v963, %v1051
  %v1084 = vmax.f32 %v968, %v1052
  %v1085 = vmax.f32 %v971, %v1053
  %v1086 = vmax.f32 %v976, %v1054
  %v1087 = vmax.f32 %v979, %v1055
  %v1088 = vmax.f32 %v984, %v1056
  %v1089 = vmax.f32 %v987, %v1057
  %v1090 = vmax.f32 %v992, %v1058
  %v1091 = vmax.f32 %v995, %v1059
  %v1092 = vmax.f32 %v1000, %v1060
  %v1093 = vmax.f32 %v1003, %v1061
  %v1094 = vmax.f32 %v1008, %v1062
  %v1095 = vmax.f32 %v1011, %v1063
  %v1096 = vmax.f32 %v1016, %v1064
  %v1097 = vmax.f32 %v1019, %v1065
  %v1098 = vmax.f32 %v1024, %v1066
  %v1099 = vmax.f32 %v1027, %v1067
  %v1100 = vmax.f32 %v1032, %v1068
  %v1101 = vmax.f32 %v1035, %v1069
  %v1102 = vpack.c.bf16 %v1071, %v1070
  %v1103 = vpack.c.bf16 %v1073, %v1072
  %v1104 = vpack.c.bf16 %v1075, %v1074
  %v1105 = vpack.c.bf16 %v1077, %v1076
  %v1106 = vpack.c.bf16 %v1079, %v1078
  %v1107 = vpack.c.bf16 %v1081, %v1080
  %v1108 = vpack.c.bf16 %v1083, %v1082
  %v1109 = vpack.c.bf16 %v1085, %v1084
  %v1110 = vpack.c.bf16 %v1087, %v1086
  %v1111 = vpack.c.bf16 %v1089, %v1088
  %v1112 = vpack.c.bf16 %v1091, %v1090
  %v1113 = vpack.c.bf16 %v1093, %v1092
  %v1114 = vpack.c.bf16 %v1095, %v1094
  %v1115 = vpack.c.bf16 %v1097, %v1096
  %v1116 = vpack.c.bf16 %v1099, %v1098
  %v1117 = vpack.c.bf16 %v1101, %v1100
  %s1118 = scalar_lea.vmem %s2, 64
  %v1119 = vld [vmem:[%s1118] sm:$0xf]
  %v1120 = vld [vmem:[%s1118 + $0x4] sm:$0xf]
  %v1121 = vld [vmem:[%s1118 + $0x8] sm:$0xf]
  %v1122 = vld [vmem:[%s1118 + $0xc] sm:$0xf]
  %v1123 = vld [vmem:[%s1118 + $0x10] sm:$0xf]
  %v1124 = vld [vmem:[%s1118 + $0x14] sm:$0xf]
  %v1125 = vld [vmem:[%s1118 + $0x18] sm:$0xf]
  %v1126 = vld [vmem:[%s1118 + $0x1c] sm:$0xf]
  %v1127 = vld [vmem:[%s1118 + $0x20] sm:$0xf]
  %v1128 = vld [vmem:[%s1118 + $0x24] sm:$0xf]
  %v1129 = vld [vmem:[%s1118 + $0x28] sm:$0xf]
  %v1130 = vld [vmem:[%s1118 + $0x2c] sm:$0xf]
  %v1131 = vld [vmem:[%s1118 + $0x30] sm:$0xf]
  %v1132 = vld [vmem:[%s1118 + $0x34] sm:$0xf]
  %v1133 = vld [vmem:[%s1118 + $0x38] sm:$0xf]
  %v1134 = vld [vmem:[%s1118 + $0x3c] sm:$0xf]
  %v1135 = vld [vmem:[%s3 + $0x2] sm:$0x1]
  %v1136 = vlaneseq
  %v1137 = vshrl.u32 %v1136, 7
  %v1138 = vsub.s32 0, %v1137
  %v1139 = vrot.slane %v1135, %v1138
  %v1156 = vunpack.c.l.b16 %v1119
  %v1157 = vunpack.c.l.b16 %v1120
  %v1158 = vunpack.c.l.b16 %v1121
  %v1159 = vunpack.c.l.b16 %v1122
  %v1160 = vunpack.c.l.b16 %v1123
  %v1161 = vunpack.c.l.b16 %v1124
  %v1162 = vunpack.c.l.b16 %v1125
  %v1163 = vunpack.c.l.b16 %v1126
  %v1164 = vunpack.c.l.b16 %v1127
  %v1165 = vunpack.c.l.b16 %v1128
  %v1166 = vunpack.c.l.b16 %v1129
  %v1167 = vunpack.c.l.b16 %v1130
  %v1168 = vunpack.c.l.b16 %v1131
  %v1169 = vunpack.c.l.b16 %v1132
  %v1170 = vunpack.c.l.b16 %v1133
  %v1171 = vunpack.c.l.b16 %v1134
  %v1172 = vpack.c.b16 %v1157, %v1156
  %v1173 = vpack.c.b16 %v1159, %v1158
  %v1174 = vpack.c.b16 %v1161, %v1160
  %v1175 = vpack.c.b16 %v1163, %v1162
  %v1176 = vpack.c.b16 %v1165, %v1164
  %v1177 = vpack.c.b16 %v1167, %v1166
  %v1178 = vpack.c.b16 %v1169, %v1168
  %v1179 = vpack.c.b16 %v1171, %v1170
  %1188 = vmatprep.subr.bf16.mxu0 0
  %1189 = vmatpush1.bf16.msra.mxu0 %v1179
  %1190 = vmatprep.subr.bf16.mxu0 0
  %1191 = vmatpush1.bf16.msra.mxu0 %v1178
  %1192 = vmatprep.subr.bf16.mxu0 0
  %1193 = vmatpush1.bf16.msra.mxu0 %v1177
  %1194 = vmatprep.subr.bf16.mxu0 0
  %1195 = vmatpush1.bf16.msra.mxu0 %v1176
  %1196 = vmatprep.subr.bf16.mxu0 0
  %1197 = vmatpush1.bf16.msra.mxu0 %v1175
  %1198 = vmatprep.subr.bf16.mxu0 0
  %1199 = vmatpush1.bf16.msra.mxu0 %v1174
  %1200 = vmatprep.subr.bf16.mxu0 0
  %1201 = vmatpush1.bf16.msra.mxu0 %v1173
  %1202 = vmatprep.subr.bf16.mxu0 0
  %1203 = vmatpush1.bf16.msra.mxu0 %v1172
  %1204 = vmatprep.subr.bf16.mxu0 0
  %1205 = vmatpush2.bf16.msra.mxu0 0
  %1206 = vmatprep.subr.bf16.mxu0 0
  %1207 = vmatpush2.bf16.msra.mxu0 0
  %1208 = vmatprep.subr.bf16.mxu0 0
  %1209 = vmatpush2.bf16.msra.mxu0 0
  %1210 = vmatprep.subr.bf16.mxu0 0
  %1211 = vmatpush2.bf16.msra.mxu0 0
  %1212 = vmatprep.subr.bf16.mxu0 0
  %1213 = vmatpush2.bf16.msra.mxu0 0
  %1214 = vmatprep.subr.bf16.mxu0 0
  %1215 = vmatpush2.bf16.msra.mxu0 0
  %1216 = vmatprep.subr.bf16.mxu0 0
  %1217 = vmatpush2.bf16.msra.mxu0 0
  %1218 = vmatprep.subr.bf16.mxu0 0
  %1219 = vmatpush2.bf16.msra.mxu0 0
  %1220 = vmatprep.mubr.bf16.mxu0 0
  %1221 = vmatmul.mubr.bf16.gmra.mxu0 %v1102
  %v1222 = vpop.f32.mrf.mxu0
  %v1223 = vadd.f32 %v1139, %v1222
  %v1224 = vpop.f32.mrf.mxu0
  %v1225 = vpop.f32.mrf.mxu0
  %v1226 = vadd.f32 %v1139, %v1225
  %v1227 = vpop.f32.mrf.mxu0
  %1228 = vmatprep.mubr.bf16.mxu0 0
  %1229 = vmatmul.mubr.bf16.gmra.mxu0 %v1103
  %v1230 = vpop.f32.mrf.mxu0
  %v1231 = vadd.f32 %v1139, %v1230
  %v1232 = vpop.f32.mrf.mxu0
  %v1233 = vpop.f32.mrf.mxu0
  %v1234 = vadd.f32 %v1139, %v1233
  %v1235 = vpop.f32.mrf.mxu0
  %1236 = vmatprep.mubr.bf16.mxu0 0
  %1237 = vmatmul.mubr.bf16.gmra.mxu0 %v1104
  %v1238 = vpop.f32.mrf.mxu0
  %v1239 = vadd.f32 %v1139, %v1238
  %v1240 = vpop.f32.mrf.mxu0
  %v1241 = vpop.f32.mrf.mxu0
  %v1242 = vadd.f32 %v1139, %v1241
  %v1243 = vpop.f32.mrf.mxu0
  %1244 = vmatprep.mubr.bf16.mxu0 0
  %1245 = vmatmul.mubr.bf16.gmra.mxu0 %v1105
  %v1246 = vpop.f32.mrf.mxu0
  %v1247 = vadd.f32 %v1139, %v1246
  %v1248 = vpop.f32.mrf.mxu0
  %v1249 = vpop.f32.mrf.mxu0
  %v1250 = vadd.f32 %v1139, %v1249
  %v1251 = vpop.f32.mrf.mxu0
  %1252 = vmatprep.mubr.bf16.mxu0 0
  %1253 = vmatmul.mubr.bf16.gmra.mxu0 %v1106
  %v1254 = vpop.f32.mrf.mxu0
  %v1255 = vadd.f32 %v1139, %v1254
  %v1256 = vpop.f32.mrf.mxu0
  %v1257 = vpop.f32.mrf.mxu0
  %v1258 = vadd.f32 %v1139, %v1257
  %v1259 = vpop.f32.mrf.mxu0
  %1260 = vmatprep.mubr.bf16.mxu0 0
  %1261 = vmatmul.mubr.bf16.gmra.mxu0 %v1107
  %v1262 = vpop.f32.mrf.mxu0
  %v1263 = vadd.f32 %v1139, %v1262
  %v1264 = vpop.f32.mrf.mxu0
  %v1265 = vpop.f32.mrf.mxu0
  %v1266 = vadd.f32 %v1139, %v1265
  %v1267 = vpop.f32.mrf.mxu0
  %1268 = vmatprep.mubr.bf16.mxu0 0
  %1269 = vmatmul.mubr.bf16.gmra.mxu0 %v1108
  %v1270 = vpop.f32.mrf.mxu0
  %v1271 = vadd.f32 %v1139, %v1270
  %v1272 = vpop.f32.mrf.mxu0
  %v1273 = vpop.f32.mrf.mxu0
  %v1274 = vadd.f32 %v1139, %v1273
  %v1275 = vpop.f32.mrf.mxu0
  %1276 = vmatprep.mubr.bf16.mxu0 0
  %1277 = vmatmul.mubr.bf16.gmra.mxu0 %v1109
  %v1278 = vpop.f32.mrf.mxu0
  %v1279 = vadd.f32 %v1139, %v1278
  %v1280 = vpop.f32.mrf.mxu0
  %v1281 = vpop.f32.mrf.mxu0
  %v1282 = vadd.f32 %v1139, %v1281
  %v1283 = vpop.f32.mrf.mxu0
  %1284 = vmatprep.mubr.bf16.mxu0 0
  %1285 = vmatmul.mubr.bf16.gmra.mxu0 %v1110
  %v1286 = vpop.f32.mrf.mxu0
  %v1287 = vadd.f32 %v1139, %v1286
  %v1288 = vpop.f32.mrf.mxu0
  %v1289 = vpop.f32.mrf.mxu0
  %v1290 = vadd.f32 %v1139, %v1289
  %v1291 = vpop.f32.mrf.mxu0
  %1292 = vmatprep.mubr.bf16.mxu0 0
  %1293 = vmatmul.mubr.bf16.gmra.mxu0 %v1111
  %v1294 = vpop.f32.mrf.mxu0
  %v1295 = vadd.f32 %v1139, %v1294
  %v1296 = vpop.f32.mrf.mxu0
  %v1297 = vpop.f32.mrf.mxu0
  %v1298 = vadd.f32 %v1139, %v1297
  %v1299 = vpop.f32.mrf.mxu0
  %1300 = vmatprep.mubr.bf16.mxu0 0
  %1301 = vmatmul.mubr.bf16.gmra.mxu0 %v1112
  %v1302 = vpop.f32.mrf.mxu0
  %v1303 = vadd.f32 %v1139, %v1302
  %v1304 = vpop.f32.mrf.mxu0
  %v1305 = vpop.f32.mrf.mxu0
  %v1306 = vadd.f32 %v1139, %v1305
  %v1307 = vpop.f32.mrf.mxu0
  %1308 = vmatprep.mubr.bf16.mxu0 0
  %1309 = vmatmul.mubr.bf16.gmra.mxu0 %v1113
  %v1310 = vpop.f32.mrf.mxu0
  %v1311 = vadd.f32 %v1139, %v1310
  %v1312 = vpop.f32.mrf.mxu0
  %v1313 = vpop.f32.mrf.mxu0
  %v1314 = vadd.f32 %v1139, %v1313
  %v1315 = vpop.f32.mrf.mxu0
  %1316 = vmatprep.mubr.bf16.mxu0 0
  %1317 = vmatmul.mubr.bf16.gmra.mxu0 %v1114
  %v1318 = vpop.f32.mrf.mxu0
  %v1319 = vadd.f32 %v1139, %v1318
  %v1320 = vpop.f32.mrf.mxu0
  %v1321 = vpop.f32.mrf.mxu0
  %v1322 = vadd.f32 %v1139, %v1321
  %v1323 = vpop.f32.mrf.mxu0
  %1324 = vmatprep.mubr.bf16.mxu0 0
  %1325 = vmatmul.mubr.bf16.gmra.mxu0 %v1115
  %v1326 = vpop.f32.mrf.mxu0
  %v1327 = vadd.f32 %v1139, %v1326
  %v1328 = vpop.f32.mrf.mxu0
  %v1329 = vpop.f32.mrf.mxu0
  %v1330 = vadd.f32 %v1139, %v1329
  %v1331 = vpop.f32.mrf.mxu0
  %1332 = vmatprep.mubr.bf16.mxu0 0
  %1333 = vmatmul.mubr.bf16.gmra.mxu0 %v1116
  %v1334 = vpop.f32.mrf.mxu0
  %v1335 = vadd.f32 %v1139, %v1334
  %v1336 = vpop.f32.mrf.mxu0
  %v1337 = vpop.f32.mrf.mxu0
  %v1338 = vadd.f32 %v1139, %v1337
  %v1339 = vpop.f32.mrf.mxu0
  %1340 = vmatprep.mubr.bf16.mxu0 0
  %1341 = vmatmul.mubr.bf16.gmra.mxu0 %v1117
  %v1342 = vpop.f32.mrf.mxu0
  %v1343 = vadd.f32 %v1139, %v1342
  %v1344 = vpop.f32.mrf.mxu0
  %v1345 = vpop.f32.mrf.mxu0
  %v1346 = vadd.f32 %v1139, %v1345
  %v1347 = vpop.f32.mrf.mxu0
  %1348 = vdwg.mxu0
  %v1349 = vmul.f32 %v1223, 0.2
  %v1350 = vmul.f32 %v1226, 0.2
  %v1351 = vmul.f32 %v1231, 0.2
  %v1352 = vmul.f32 %v1234, 0.2
  %v1353 = vmul.f32 %v1239, 0.2
  %v1354 = vmul.f32 %v1242, 0.2
  %v1355 = vmul.f32 %v1247, 0.2
  %v1356 = vmul.f32 %v1250, 0.2
  %v1357 = vmul.f32 %v1255, 0.2
  %v1358 = vmul.f32 %v1258, 0.2
  %v1359 = vmul.f32 %v1263, 0.2
  %v1360 = vmul.f32 %v1266, 0.2
  %v1361 = vmul.f32 %v1271, 0.2
  %v1362 = vmul.f32 %v1274, 0.2
  %v1363 = vmul.f32 %v1279, 0.2
  %v1364 = vmul.f32 %v1282, 0.2
  %v1365 = vmul.f32 %v1287, 0.2
  %v1366 = vmul.f32 %v1290, 0.2
  %v1367 = vmul.f32 %v1295, 0.2
  %v1368 = vmul.f32 %v1298, 0.2
  %v1369 = vmul.f32 %v1303, 0.2
  %v1370 = vmul.f32 %v1306, 0.2
  %v1371 = vmul.f32 %v1311, 0.2
  %v1372 = vmul.f32 %v1314, 0.2
  %v1373 = vmul.f32 %v1319, 0.2
  %v1374 = vmul.f32 %v1322, 0.2
  %v1375 = vmul.f32 %v1327, 0.2
  %v1376 = vmul.f32 %v1330, 0.2
  %v1377 = vmul.f32 %v1335, 0.2
  %v1378 = vmul.f32 %v1338, 0.2
  %v1379 = vmul.f32 %v1343, 0.2
  %v1380 = vmul.f32 %v1346, 0.2
  %v1381 = vmax.f32 %v1223, %v1349
  %v1382 = vmax.f32 %v1226, %v1350
  %v1383 = vmax.f32 %v1231, %v1351
  %v1384 = vmax.f32 %v1234, %v1352
  %v1385 = vmax.f32 %v1239, %v1353
  %v1386 = vmax.f32 %v1242, %v1354
  %v1387 = vmax.f32 %v1247, %v1355
  %v1388 = vmax.f32 %v1250, %v1356
  %v1389 = vmax.f32 %v1255, %v1357
  %v1390 = vmax.f32 %v1258, %v1358
  %v1391 = vmax.f32 %v1263, %v1359
  %v1392 = vmax.f32 %v1266, %v1360
  %v1393 = vmax.f32 %v1271, %v1361
  %v1394 = vmax.f32 %v1274, %v1362
  %v1395 = vmax.f32 %v1279, %v1363
  %v1396 = vmax.f32 %v1282, %v1364
  %v1397 = vmax.f32 %v1287, %v1365
  %v1398 = vmax.f32 %v1290, %v1366
  %v1399 = vmax.f32 %v1295, %v1367
  %v1400 = vmax.f32 %v1298, %v1368
  %v1401 = vmax.f32 %v1303, %v1369
  %v1402 = vmax.f32 %v1306, %v1370
  %v1403 = vmax.f32 %v1311, %v1371
  %v1404 = vmax.f32 %v1314, %v1372
  %v1405 = vmax.f32 %v1319, %v1373
  %v1406 = vmax.f32 %v1322, %v1374
  %v1407 = vmax.f32 %v1327, %v1375
  %v1408 = vmax.f32 %v1330, %v1376
  %v1409 = vmax.f32 %v1335, %v1377
  %v1410 = vmax.f32 %v1338, %v1378
  %v1411 = vmax.f32 %v1343, %v1379
  %v1412 = vmax.f32 %v1346, %v1380
  %v1413 = vpack.c.bf16 %v1382, %v1381
  %v1414 = vpack.c.bf16 %v1384, %v1383
  %v1415 = vpack.c.bf16 %v1386, %v1385
  %v1416 = vpack.c.bf16 %v1388, %v1387
  %v1417 = vpack.c.bf16 %v1390, %v1389
  %v1418 = vpack.c.bf16 %v1392, %v1391
  %v1419 = vpack.c.bf16 %v1394, %v1393
  %v1420 = vpack.c.bf16 %v1396, %v1395
  %v1421 = vpack.c.bf16 %v1398, %v1397
  %v1422 = vpack.c.bf16 %v1400, %v1399
  %v1423 = vpack.c.bf16 %v1402, %v1401
  %v1424 = vpack.c.bf16 %v1404, %v1403
  %v1425 = vpack.c.bf16 %v1406, %v1405
  %v1426 = vpack.c.bf16 %v1408, %v1407
  %v1427 = vpack.c.bf16 %v1410, %v1409
  %v1428 = vpack.c.bf16 %v1412, %v1411
  %s1429 = scalar_lea.vmem %s2, 128
  %v1430 = vld [vmem:[%s1429] sm:$0xf]
  %v1431 = vld [vmem:[%s1429 + $0x4] sm:$0xf]
  %v1432 = vld [vmem:[%s1429 + $0x8] sm:$0xf]
  %v1433 = vld [vmem:[%s1429 + $0xc] sm:$0xf]
  %v1434 = vld [vmem:[%s1429 + $0x10] sm:$0xf]
  %v1435 = vld [vmem:[%s1429 + $0x14] sm:$0xf]
  %v1436 = vld [vmem:[%s1429 + $0x18] sm:$0xf]
  %v1437 = vld [vmem:[%s1429 + $0x1c] sm:$0xf]
  %v1438 = vld [vmem:[%s1429 + $0x20] sm:$0xf]
  %v1439 = vld [vmem:[%s1429 + $0x24] sm:$0xf]
  %v1440 = vld [vmem:[%s1429 + $0x28] sm:$0xf]
  %v1441 = vld [vmem:[%s1429 + $0x2c] sm:$0xf]
  %v1442 = vld [vmem:[%s1429 + $0x30] sm:$0xf]
  %v1443 = vld [vmem:[%s1429 + $0x34] sm:$0xf]
  %v1444 = vld [vmem:[%s1429 + $0x38] sm:$0xf]
  %v1445 = vld [vmem:[%s1429 + $0x3c] sm:$0xf]
  %v1446 = vld [vmem:[%s3 + $0x3] sm:$0x1]
  %v1447 = vlaneseq
  %v1448 = vshrl.u32 %v1447, 7
  %v1449 = vsub.s32 0, %v1448
  %v1450 = vrot.slane %v1446, %v1449
  %v1467 = vunpack.c.l.b16 %v1430
  %v1468 = vunpack.c.l.b16 %v1431
  %v1469 = vunpack.c.l.b16 %v1432
  %v1470 = vunpack.c.l.b16 %v1433
  %v1471 = vunpack.c.l.b16 %v1434
  %v1472 = vunpack.c.l.b16 %v1435
  %v1473 = vunpack.c.l.b16 %v1436
  %v1474 = vunpack.c.l.b16 %v1437
  %v1475 = vunpack.c.l.b16 %v1438
  %v1476 = vunpack.c.l.b16 %v1439
  %v1477 = vunpack.c.l.b16 %v1440
  %v1478 = vunpack.c.l.b16 %v1441
  %v1479 = vunpack.c.l.b16 %v1442
  %v1480 = vunpack.c.l.b16 %v1443
  %v1481 = vunpack.c.l.b16 %v1444
  %v1482 = vunpack.c.l.b16 %v1445
  %v1483 = vpack.c.b16 %v1468, %v1467
  %v1484 = vpack.c.b16 %v1470, %v1469
  %v1485 = vpack.c.b16 %v1472, %v1471
  %v1486 = vpack.c.b16 %v1474, %v1473
  %v1487 = vpack.c.b16 %v1476, %v1475
  %v1488 = vpack.c.b16 %v1478, %v1477
  %v1489 = vpack.c.b16 %v1480, %v1479
  %v1490 = vpack.c.b16 %v1482, %v1481
  %1499 = vmatprep.subr.bf16.mxu0 0
  %1500 = vmatpush1.bf16.msra.mxu0 %v1490
  %1501 = vmatprep.subr.bf16.mxu0 0
  %1502 = vmatpush1.bf16.msra.mxu0 %v1489
  %1503 = vmatprep.subr.bf16.mxu0 0
  %1504 = vmatpush1.bf16.msra.mxu0 %v1488
  %1505 = vmatprep.subr.bf16.mxu0 0
  %1506 = vmatpush1.bf16.msra.mxu0 %v1487
  %1507 = vmatprep.subr.bf16.mxu0 0
  %1508 = vmatpush1.bf16.msra.mxu0 %v1486
  %1509 = vmatprep.subr.bf16.mxu0 0
  %1510 = vmatpush1.bf16.msra.mxu0 %v1485
  %1511 = vmatprep.subr.bf16.mxu0 0
  %1512 = vmatpush1.bf16.msra.mxu0 %v1484
  %1513 = vmatprep.subr.bf16.mxu0 0
  %1514 = vmatpush1.bf16.msra.mxu0 %v1483
  %1515 = vmatprep.subr.bf16.mxu0 0
  %1516 = vmatpush2.bf16.msra.mxu0 0
  %1517 = vmatprep.subr.bf16.mxu0 0
  %1518 = vmatpush2.bf16.msra.mxu0 0
  %1519 = vmatprep.subr.bf16.mxu0 0
  %1520 = vmatpush2.bf16.msra.mxu0 0
  %1521 = vmatprep.subr.bf16.mxu0 0
  %1522 = vmatpush2.bf16.msra.mxu0 0
  %1523 = vmatprep.subr.bf16.mxu0 0
  %1524 = vmatpush2.bf16.msra.mxu0 0
  %1525 = vmatprep.subr.bf16.mxu0 0
  %1526 = vmatpush2.bf16.msra.mxu0 0
  %1527 = vmatprep.subr.bf16.mxu0 0
  %1528 = vmatpush2.bf16.msra.mxu0 0
  %1529 = vmatprep.subr.bf16.mxu0 0
  %1530 = vmatpush2.bf16.msra.mxu0 0
  %1531 = vmatprep.mubr.bf16.mxu0 0
  %1532 = vmatmul.mubr.bf16.gmra.mxu0 %v1413
  %v1533 = vpop.f32.mrf.mxu0
  %v1534 = vadd.f32 %v1450, %v1533
  %v1535 = vpop.f32.mrf.mxu0
  %v1536 = vpop.f32.mrf.mxu0
  %v1537 = vadd.f32 %v1450, %v1536
  %v1538 = vpop.f32.mrf.mxu0
  %1539 = vmatprep.mubr.bf16.mxu0 0
  %1540 = vmatmul.mubr.bf16.gmra.mxu0 %v1414
  %v1541 = vpop.f32.mrf.mxu0
  %v1542 = vadd.f32 %v1450, %v1541
  %v1543 = vpop.f32.mrf.mxu0
  %v1544 = vpop.f32.mrf.mxu0
  %v1545 = vadd.f32 %v1450, %v1544
  %v1546 = vpop.f32.mrf.mxu0
  %1547 = vmatprep.mubr.bf16.mxu0 0
  %1548 = vmatmul.mubr.bf16.gmra.mxu0 %v1415
  %v1549 = vpop.f32.mrf.mxu0
  %v1550 = vadd.f32 %v1450, %v1549
  %v1551 = vpop.f32.mrf.mxu0
  %v1552 = vpop.f32.mrf.mxu0
  %v1553 = vadd.f32 %v1450, %v1552
  %v1554 = vpop.f32.mrf.mxu0
  %1555 = vmatprep.mubr.bf16.mxu0 0
  %1556 = vmatmul.mubr.bf16.gmra.mxu0 %v1416
  %v1557 = vpop.f32.mrf.mxu0
  %v1558 = vadd.f32 %v1450, %v1557
  %v1559 = vpop.f32.mrf.mxu0
  %v1560 = vpop.f32.mrf.mxu0
  %v1561 = vadd.f32 %v1450, %v1560
  %v1562 = vpop.f32.mrf.mxu0
  %1563 = vmatprep.mubr.bf16.mxu0 0
  %1564 = vmatmul.mubr.bf16.gmra.mxu0 %v1417
  %v1565 = vpop.f32.mrf.mxu0
  %v1566 = vadd.f32 %v1450, %v1565
  %v1567 = vpop.f32.mrf.mxu0
  %v1568 = vpop.f32.mrf.mxu0
  %v1569 = vadd.f32 %v1450, %v1568
  %v1570 = vpop.f32.mrf.mxu0
  %1571 = vmatprep.mubr.bf16.mxu0 0
  %1572 = vmatmul.mubr.bf16.gmra.mxu0 %v1418
  %v1573 = vpop.f32.mrf.mxu0
  %v1574 = vadd.f32 %v1450, %v1573
  %v1575 = vpop.f32.mrf.mxu0
  %v1576 = vpop.f32.mrf.mxu0
  %v1577 = vadd.f32 %v1450, %v1576
  %v1578 = vpop.f32.mrf.mxu0
  %1579 = vmatprep.mubr.bf16.mxu0 0
  %1580 = vmatmul.mubr.bf16.gmra.mxu0 %v1419
  %v1581 = vpop.f32.mrf.mxu0
  %v1582 = vadd.f32 %v1450, %v1581
  %v1583 = vpop.f32.mrf.mxu0
  %v1584 = vpop.f32.mrf.mxu0
  %v1585 = vadd.f32 %v1450, %v1584
  %v1586 = vpop.f32.mrf.mxu0
  %1587 = vmatprep.mubr.bf16.mxu0 0
  %1588 = vmatmul.mubr.bf16.gmra.mxu0 %v1420
  %v1589 = vpop.f32.mrf.mxu0
  %v1590 = vadd.f32 %v1450, %v1589
  %v1591 = vpop.f32.mrf.mxu0
  %v1592 = vpop.f32.mrf.mxu0
  %v1593 = vadd.f32 %v1450, %v1592
  %v1594 = vpop.f32.mrf.mxu0
  %1595 = vmatprep.mubr.bf16.mxu0 0
  %1596 = vmatmul.mubr.bf16.gmra.mxu0 %v1421
  %v1597 = vpop.f32.mrf.mxu0
  %v1598 = vadd.f32 %v1450, %v1597
  %v1599 = vpop.f32.mrf.mxu0
  %v1600 = vpop.f32.mrf.mxu0
  %v1601 = vadd.f32 %v1450, %v1600
  %v1602 = vpop.f32.mrf.mxu0
  %1603 = vmatprep.mubr.bf16.mxu0 0
  %1604 = vmatmul.mubr.bf16.gmra.mxu0 %v1422
  %v1605 = vpop.f32.mrf.mxu0
  %v1606 = vadd.f32 %v1450, %v1605
  %v1607 = vpop.f32.mrf.mxu0
  %v1608 = vpop.f32.mrf.mxu0
  %v1609 = vadd.f32 %v1450, %v1608
  %v1610 = vpop.f32.mrf.mxu0
  %1611 = vmatprep.mubr.bf16.mxu0 0
  %1612 = vmatmul.mubr.bf16.gmra.mxu0 %v1423
  %v1613 = vpop.f32.mrf.mxu0
  %v1614 = vadd.f32 %v1450, %v1613
  %v1615 = vpop.f32.mrf.mxu0
  %v1616 = vpop.f32.mrf.mxu0
  %v1617 = vadd.f32 %v1450, %v1616
  %v1618 = vpop.f32.mrf.mxu0
  %1619 = vmatprep.mubr.bf16.mxu0 0
  %1620 = vmatmul.mubr.bf16.gmra.mxu0 %v1424
  %v1621 = vpop.f32.mrf.mxu0
  %v1622 = vadd.f32 %v1450, %v1621
  %v1623 = vpop.f32.mrf.mxu0
  %v1624 = vpop.f32.mrf.mxu0
  %v1625 = vadd.f32 %v1450, %v1624
  %v1626 = vpop.f32.mrf.mxu0
  %1627 = vmatprep.mubr.bf16.mxu0 0
  %1628 = vmatmul.mubr.bf16.gmra.mxu0 %v1425
  %v1629 = vpop.f32.mrf.mxu0
  %v1630 = vadd.f32 %v1450, %v1629
  %v1631 = vpop.f32.mrf.mxu0
  %v1632 = vpop.f32.mrf.mxu0
  %v1633 = vadd.f32 %v1450, %v1632
  %v1634 = vpop.f32.mrf.mxu0
  %1635 = vmatprep.mubr.bf16.mxu0 0
  %1636 = vmatmul.mubr.bf16.gmra.mxu0 %v1426
  %v1637 = vpop.f32.mrf.mxu0
  %v1638 = vadd.f32 %v1450, %v1637
  %v1639 = vpop.f32.mrf.mxu0
  %v1640 = vpop.f32.mrf.mxu0
  %v1641 = vadd.f32 %v1450, %v1640
  %v1642 = vpop.f32.mrf.mxu0
  %1643 = vmatprep.mubr.bf16.mxu0 0
  %1644 = vmatmul.mubr.bf16.gmra.mxu0 %v1427
  %v1645 = vpop.f32.mrf.mxu0
  %v1646 = vadd.f32 %v1450, %v1645
  %v1647 = vpop.f32.mrf.mxu0
  %v1648 = vpop.f32.mrf.mxu0
  %v1649 = vadd.f32 %v1450, %v1648
  %v1650 = vpop.f32.mrf.mxu0
  %1651 = vmatprep.mubr.bf16.mxu0 0
  %1652 = vmatmul.mubr.bf16.gmra.mxu0 %v1428
  %v1653 = vpop.f32.mrf.mxu0
  %v1654 = vadd.f32 %v1450, %v1653
  %v1655 = vpop.f32.mrf.mxu0
  %v1656 = vpop.f32.mrf.mxu0
  %v1657 = vadd.f32 %v1450, %v1656
  %v1658 = vpop.f32.mrf.mxu0
  %1659 = vdwg.mxu0
  %v1660 = vmul.f32 %v1534, 0.2
  %v1661 = vmul.f32 %v1537, 0.2
  %v1662 = vmul.f32 %v1542, 0.2
  %v1663 = vmul.f32 %v1545, 0.2
  %v1664 = vmul.f32 %v1550, 0.2
  %v1665 = vmul.f32 %v1553, 0.2
  %v1666 = vmul.f32 %v1558, 0.2
  %v1667 = vmul.f32 %v1561, 0.2
  %v1668 = vmul.f32 %v1566, 0.2
  %v1669 = vmul.f32 %v1569, 0.2
  %v1670 = vmul.f32 %v1574, 0.2
  %v1671 = vmul.f32 %v1577, 0.2
  %v1672 = vmul.f32 %v1582, 0.2
  %v1673 = vmul.f32 %v1585, 0.2
  %v1674 = vmul.f32 %v1590, 0.2
  %v1675 = vmul.f32 %v1593, 0.2
  %v1676 = vmul.f32 %v1598, 0.2
  %v1677 = vmul.f32 %v1601, 0.2
  %v1678 = vmul.f32 %v1606, 0.2
  %v1679 = vmul.f32 %v1609, 0.2
  %v1680 = vmul.f32 %v1614, 0.2
  %v1681 = vmul.f32 %v1617, 0.2
  %v1682 = vmul.f32 %v1622, 0.2
  %v1683 = vmul.f32 %v1625, 0.2
  %v1684 = vmul.f32 %v1630, 0.2
  %v1685 = vmul.f32 %v1633, 0.2
  %v1686 = vmul.f32 %v1638, 0.2
  %v1687 = vmul.f32 %v1641, 0.2
  %v1688 = vmul.f32 %v1646, 0.2
  %v1689 = vmul.f32 %v1649, 0.2
  %v1690 = vmul.f32 %v1654, 0.2
  %v1691 = vmul.f32 %v1657, 0.2
  %v1692 = vmax.f32 %v1534, %v1660
  %v1693 = vmax.f32 %v1537, %v1661
  %v1694 = vmax.f32 %v1542, %v1662
  %v1695 = vmax.f32 %v1545, %v1663
  %v1696 = vmax.f32 %v1550, %v1664
  %v1697 = vmax.f32 %v1553, %v1665
  %v1698 = vmax.f32 %v1558, %v1666
  %v1699 = vmax.f32 %v1561, %v1667
  %v1700 = vmax.f32 %v1566, %v1668
  %v1701 = vmax.f32 %v1569, %v1669
  %v1702 = vmax.f32 %v1574, %v1670
  %v1703 = vmax.f32 %v1577, %v1671
  %v1704 = vmax.f32 %v1582, %v1672
  %v1705 = vmax.f32 %v1585, %v1673
  %v1706 = vmax.f32 %v1590, %v1674
  %v1707 = vmax.f32 %v1593, %v1675
  %v1708 = vmax.f32 %v1598, %v1676
  %v1709 = vmax.f32 %v1601, %v1677
  %v1710 = vmax.f32 %v1606, %v1678
  %v1711 = vmax.f32 %v1609, %v1679
  %v1712 = vmax.f32 %v1614, %v1680
  %v1713 = vmax.f32 %v1617, %v1681
  %v1714 = vmax.f32 %v1622, %v1682
  %v1715 = vmax.f32 %v1625, %v1683
  %v1716 = vmax.f32 %v1630, %v1684
  %v1717 = vmax.f32 %v1633, %v1685
  %v1718 = vmax.f32 %v1638, %v1686
  %v1719 = vmax.f32 %v1641, %v1687
  %v1720 = vmax.f32 %v1646, %v1688
  %v1721 = vmax.f32 %v1649, %v1689
  %v1722 = vmax.f32 %v1654, %v1690
  %v1723 = vmax.f32 %v1657, %v1691
  %v1724 = vpack.c.bf16 %v1693, %v1692
  %v1725 = vpack.c.bf16 %v1695, %v1694
  %v1726 = vpack.c.bf16 %v1697, %v1696
  %v1727 = vpack.c.bf16 %v1699, %v1698
  %v1728 = vpack.c.bf16 %v1701, %v1700
  %v1729 = vpack.c.bf16 %v1703, %v1702
  %v1730 = vpack.c.bf16 %v1705, %v1704
  %v1731 = vpack.c.bf16 %v1707, %v1706
  %v1732 = vpack.c.bf16 %v1709, %v1708
  %v1733 = vpack.c.bf16 %v1711, %v1710
  %v1734 = vpack.c.bf16 %v1713, %v1712
  %v1735 = vpack.c.bf16 %v1715, %v1714
  %v1736 = vpack.c.bf16 %v1717, %v1716
  %v1737 = vpack.c.bf16 %v1719, %v1718
  %v1738 = vpack.c.bf16 %v1721, %v1720
  %v1739 = vpack.c.bf16 %v1723, %v1722
  %s1740 = scalar_lea.vmem %s2, 192
  %v1741 = vld [vmem:[%s1740] sm:$0xf]
  %v1742 = vld [vmem:[%s1740 + $0x4] sm:$0xf]
  %v1743 = vld [vmem:[%s1740 + $0x8] sm:$0xf]
  %v1744 = vld [vmem:[%s1740 + $0xc] sm:$0xf]
  %v1745 = vld [vmem:[%s1740 + $0x10] sm:$0xf]
  %v1746 = vld [vmem:[%s1740 + $0x14] sm:$0xf]
  %v1747 = vld [vmem:[%s1740 + $0x18] sm:$0xf]
  %v1748 = vld [vmem:[%s1740 + $0x1c] sm:$0xf]
  %v1749 = vld [vmem:[%s1740 + $0x20] sm:$0xf]
  %v1750 = vld [vmem:[%s1740 + $0x24] sm:$0xf]
  %v1751 = vld [vmem:[%s1740 + $0x28] sm:$0xf]
  %v1752 = vld [vmem:[%s1740 + $0x2c] sm:$0xf]
  %v1753 = vld [vmem:[%s1740 + $0x30] sm:$0xf]
  %v1754 = vld [vmem:[%s1740 + $0x34] sm:$0xf]
  %v1755 = vld [vmem:[%s1740 + $0x38] sm:$0xf]
  %v1756 = vld [vmem:[%s1740 + $0x3c] sm:$0xf]
  %v1757 = vld [vmem:[%s3 + $0x4] sm:$0x1]
  %v1758 = vlaneseq
  %v1759 = vshrl.u32 %v1758, 7
  %v1760 = vsub.s32 0, %v1759
  %v1761 = vrot.slane %v1757, %v1760
  %v1778 = vunpack.c.l.b16 %v1741
  %v1779 = vunpack.c.l.b16 %v1742
  %v1780 = vunpack.c.l.b16 %v1743
  %v1781 = vunpack.c.l.b16 %v1744
  %v1782 = vunpack.c.l.b16 %v1745
  %v1783 = vunpack.c.l.b16 %v1746
  %v1784 = vunpack.c.l.b16 %v1747
  %v1785 = vunpack.c.l.b16 %v1748
  %v1786 = vunpack.c.l.b16 %v1749
  %v1787 = vunpack.c.l.b16 %v1750
  %v1788 = vunpack.c.l.b16 %v1751
  %v1789 = vunpack.c.l.b16 %v1752
  %v1790 = vunpack.c.l.b16 %v1753
  %v1791 = vunpack.c.l.b16 %v1754
  %v1792 = vunpack.c.l.b16 %v1755
  %v1793 = vunpack.c.l.b16 %v1756
  %v1794 = vpack.c.b16 %v1779, %v1778
  %v1795 = vpack.c.b16 %v1781, %v1780
  %v1796 = vpack.c.b16 %v1783, %v1782
  %v1797 = vpack.c.b16 %v1785, %v1784
  %v1798 = vpack.c.b16 %v1787, %v1786
  %v1799 = vpack.c.b16 %v1789, %v1788
  %v1800 = vpack.c.b16 %v1791, %v1790
  %v1801 = vpack.c.b16 %v1793, %v1792
  %1810 = vmatprep.subr.bf16.mxu0 0
  %1811 = vmatpush1.bf16.msra.mxu0 %v1801
  %1812 = vmatprep.subr.bf16.mxu0 0
  %1813 = vmatpush1.bf16.msra.mxu0 %v1800
  %1814 = vmatprep.subr.bf16.mxu0 0
  %1815 = vmatpush1.bf16.msra.mxu0 %v1799
  %1816 = vmatprep.subr.bf16.mxu0 0
  %1817 = vmatpush1.bf16.msra.mxu0 %v1798
  %1818 = vmatprep.subr.bf16.mxu0 0
  %1819 = vmatpush1.bf16.msra.mxu0 %v1797
  %1820 = vmatprep.subr.bf16.mxu0 0
  %1821 = vmatpush1.bf16.msra.mxu0 %v1796
  %1822 = vmatprep.subr.bf16.mxu0 0
  %1823 = vmatpush1.bf16.msra.mxu0 %v1795
  %1824 = vmatprep.subr.bf16.mxu0 0
  %1825 = vmatpush1.bf16.msra.mxu0 %v1794
  %1826 = vmatprep.subr.bf16.mxu0 0
  %1827 = vmatpush2.bf16.msra.mxu0 0
  %1828 = vmatprep.subr.bf16.mxu0 0
  %1829 = vmatpush2.bf16.msra.mxu0 0
  %1830 = vmatprep.subr.bf16.mxu0 0
  %1831 = vmatpush2.bf16.msra.mxu0 0
  %1832 = vmatprep.subr.bf16.mxu0 0
  %1833 = vmatpush2.bf16.msra.mxu0 0
  %1834 = vmatprep.subr.bf16.mxu0 0
  %1835 = vmatpush2.bf16.msra.mxu0 0
  %1836 = vmatprep.subr.bf16.mxu0 0
  %1837 = vmatpush2.bf16.msra.mxu0 0
  %1838 = vmatprep.subr.bf16.mxu0 0
  %1839 = vmatpush2.bf16.msra.mxu0 0
  %1840 = vmatprep.subr.bf16.mxu0 0
  %1841 = vmatpush2.bf16.msra.mxu0 0
  %1842 = vmatprep.mubr.bf16.mxu0 0
  %1843 = vmatmul.mubr.bf16.gmra.mxu0 %v1724
  %v1844 = vpop.f32.mrf.mxu0
  %v1845 = vadd.f32 %v1761, %v1844
  %v1846 = vpop.f32.mrf.mxu0
  %v1847 = vpop.f32.mrf.mxu0
  %v1848 = vadd.f32 %v1761, %v1847
  %v1849 = vpop.f32.mrf.mxu0
  %1850 = vmatprep.mubr.bf16.mxu0 0
  %1851 = vmatmul.mubr.bf16.gmra.mxu0 %v1725
  %v1852 = vpop.f32.mrf.mxu0
  %v1853 = vadd.f32 %v1761, %v1852
  %v1854 = vpop.f32.mrf.mxu0
  %v1855 = vpop.f32.mrf.mxu0
  %v1856 = vadd.f32 %v1761, %v1855
  %v1857 = vpop.f32.mrf.mxu0
  %1858 = vmatprep.mubr.bf16.mxu0 0
  %1859 = vmatmul.mubr.bf16.gmra.mxu0 %v1726
  %v1860 = vpop.f32.mrf.mxu0
  %v1861 = vadd.f32 %v1761, %v1860
  %v1862 = vpop.f32.mrf.mxu0
  %v1863 = vpop.f32.mrf.mxu0
  %v1864 = vadd.f32 %v1761, %v1863
  %v1865 = vpop.f32.mrf.mxu0
  %1866 = vmatprep.mubr.bf16.mxu0 0
  %1867 = vmatmul.mubr.bf16.gmra.mxu0 %v1727
  %v1868 = vpop.f32.mrf.mxu0
  %v1869 = vadd.f32 %v1761, %v1868
  %v1870 = vpop.f32.mrf.mxu0
  %v1871 = vpop.f32.mrf.mxu0
  %v1872 = vadd.f32 %v1761, %v1871
  %v1873 = vpop.f32.mrf.mxu0
  %1874 = vmatprep.mubr.bf16.mxu0 0
  %1875 = vmatmul.mubr.bf16.gmra.mxu0 %v1728
  %v1876 = vpop.f32.mrf.mxu0
  %v1877 = vadd.f32 %v1761, %v1876
  %v1878 = vpop.f32.mrf.mxu0
  %v1879 = vpop.f32.mrf.mxu0
  %v1880 = vadd.f32 %v1761, %v1879
  %v1881 = vpop.f32.mrf.mxu0
  %1882 = vmatprep.mubr.bf16.mxu0 0
  %1883 = vmatmul.mubr.bf16.gmra.mxu0 %v1729
  %v1884 = vpop.f32.mrf.mxu0
  %v1885 = vadd.f32 %v1761, %v1884
  %v1886 = vpop.f32.mrf.mxu0
  %v1887 = vpop.f32.mrf.mxu0
  %v1888 = vadd.f32 %v1761, %v1887
  %v1889 = vpop.f32.mrf.mxu0
  %1890 = vmatprep.mubr.bf16.mxu0 0
  %1891 = vmatmul.mubr.bf16.gmra.mxu0 %v1730
  %v1892 = vpop.f32.mrf.mxu0
  %v1893 = vadd.f32 %v1761, %v1892
  %v1894 = vpop.f32.mrf.mxu0
  %v1895 = vpop.f32.mrf.mxu0
  %v1896 = vadd.f32 %v1761, %v1895
  %v1897 = vpop.f32.mrf.mxu0
  %1898 = vmatprep.mubr.bf16.mxu0 0
  %1899 = vmatmul.mubr.bf16.gmra.mxu0 %v1731
  %v1900 = vpop.f32.mrf.mxu0
  %v1901 = vadd.f32 %v1761, %v1900
  %v1902 = vpop.f32.mrf.mxu0
  %v1903 = vpop.f32.mrf.mxu0
  %v1904 = vadd.f32 %v1761, %v1903
  %v1905 = vpop.f32.mrf.mxu0
  %1906 = vmatprep.mubr.bf16.mxu0 0
  %1907 = vmatmul.mubr.bf16.gmra.mxu0 %v1732
  %v1908 = vpop.f32.mrf.mxu0
  %v1909 = vadd.f32 %v1761, %v1908
  %v1910 = vpop.f32.mrf.mxu0
  %v1911 = vpop.f32.mrf.mxu0
  %v1912 = vadd.f32 %v1761, %v1911
  %v1913 = vpop.f32.mrf.mxu0
  %1914 = vmatprep.mubr.bf16.mxu0 0
  %1915 = vmatmul.mubr.bf16.gmra.mxu0 %v1733
  %v1916 = vpop.f32.mrf.mxu0
  %v1917 = vadd.f32 %v1761, %v1916
  %v1918 = vpop.f32.mrf.mxu0
  %v1919 = vpop.f32.mrf.mxu0
  %v1920 = vadd.f32 %v1761, %v1919
  %v1921 = vpop.f32.mrf.mxu0
  %1922 = vmatprep.mubr.bf16.mxu0 0
  %1923 = vmatmul.mubr.bf16.gmra.mxu0 %v1734
  %v1924 = vpop.f32.mrf.mxu0
  %v1925 = vadd.f32 %v1761, %v1924
  %v1926 = vpop.f32.mrf.mxu0
  %v1927 = vpop.f32.mrf.mxu0
  %v1928 = vadd.f32 %v1761, %v1927
  %v1929 = vpop.f32.mrf.mxu0
  %1930 = vmatprep.mubr.bf16.mxu0 0
  %1931 = vmatmul.mubr.bf16.gmra.mxu0 %v1735
  %v1932 = vpop.f32.mrf.mxu0
  %v1933 = vadd.f32 %v1761, %v1932
  %v1934 = vpop.f32.mrf.mxu0
  %v1935 = vpop.f32.mrf.mxu0
  %v1936 = vadd.f32 %v1761, %v1935
  %v1937 = vpop.f32.mrf.mxu0
  %1938 = vmatprep.mubr.bf16.mxu0 0
  %1939 = vmatmul.mubr.bf16.gmra.mxu0 %v1736
  %v1940 = vpop.f32.mrf.mxu0
  %v1941 = vadd.f32 %v1761, %v1940
  %v1942 = vpop.f32.mrf.mxu0
  %v1943 = vpop.f32.mrf.mxu0
  %v1944 = vadd.f32 %v1761, %v1943
  %v1945 = vpop.f32.mrf.mxu0
  %1946 = vmatprep.mubr.bf16.mxu0 0
  %1947 = vmatmul.mubr.bf16.gmra.mxu0 %v1737
  %v1948 = vpop.f32.mrf.mxu0
  %v1949 = vadd.f32 %v1761, %v1948
  %v1950 = vpop.f32.mrf.mxu0
  %v1951 = vpop.f32.mrf.mxu0
  %v1952 = vadd.f32 %v1761, %v1951
  %v1953 = vpop.f32.mrf.mxu0
  %1954 = vmatprep.mubr.bf16.mxu0 0
  %1955 = vmatmul.mubr.bf16.gmra.mxu0 %v1738
  %v1956 = vpop.f32.mrf.mxu0
  %v1957 = vadd.f32 %v1761, %v1956
  %v1958 = vpop.f32.mrf.mxu0
  %v1959 = vpop.f32.mrf.mxu0
  %v1960 = vadd.f32 %v1761, %v1959
  %v1961 = vpop.f32.mrf.mxu0
  %1962 = vmatprep.mubr.bf16.mxu0 0
  %1963 = vmatmul.mubr.bf16.gmra.mxu0 %v1739
  %v1964 = vpop.f32.mrf.mxu0
  %v1965 = vadd.f32 %v1761, %v1964
  %v1966 = vpop.f32.mrf.mxu0
  %v1967 = vpop.f32.mrf.mxu0
  %v1968 = vadd.f32 %v1761, %v1967
  %v1969 = vpop.f32.mrf.mxu0
  %1970 = vdwg.mxu0
  %v1971 = vmul.f32 %v1845, 0.2
  %v1972 = vmul.f32 %v1848, 0.2
  %v1973 = vmul.f32 %v1853, 0.2
  %v1974 = vmul.f32 %v1856, 0.2
  %v1975 = vmul.f32 %v1861, 0.2
  %v1976 = vmul.f32 %v1864, 0.2
  %v1977 = vmul.f32 %v1869, 0.2
  %v1978 = vmul.f32 %v1872, 0.2
  %v1979 = vmul.f32 %v1877, 0.2
  %v1980 = vmul.f32 %v1880, 0.2
  %v1981 = vmul.f32 %v1885, 0.2
  %v1982 = vmul.f32 %v1888, 0.2
  %v1983 = vmul.f32 %v1893, 0.2
  %v1984 = vmul.f32 %v1896, 0.2
  %v1985 = vmul.f32 %v1901, 0.2
  %v1986 = vmul.f32 %v1904, 0.2
  %v1987 = vmul.f32 %v1909, 0.2
  %v1988 = vmul.f32 %v1912, 0.2
  %v1989 = vmul.f32 %v1917, 0.2
  %v1990 = vmul.f32 %v1920, 0.2
  %v1991 = vmul.f32 %v1925, 0.2
  %v1992 = vmul.f32 %v1928, 0.2
  %v1993 = vmul.f32 %v1933, 0.2
  %v1994 = vmul.f32 %v1936, 0.2
  %v1995 = vmul.f32 %v1941, 0.2
  %v1996 = vmul.f32 %v1944, 0.2
  %v1997 = vmul.f32 %v1949, 0.2
  %v1998 = vmul.f32 %v1952, 0.2
  %v1999 = vmul.f32 %v1957, 0.2
  %v2000 = vmul.f32 %v1960, 0.2
  %v2001 = vmul.f32 %v1965, 0.2
  %v2002 = vmul.f32 %v1968, 0.2
  %v2003 = vmax.f32 %v1845, %v1971
  %v2004 = vmax.f32 %v1848, %v1972
  %v2005 = vmax.f32 %v1853, %v1973
  %v2006 = vmax.f32 %v1856, %v1974
  %v2007 = vmax.f32 %v1861, %v1975
  %v2008 = vmax.f32 %v1864, %v1976
  %v2009 = vmax.f32 %v1869, %v1977
  %v2010 = vmax.f32 %v1872, %v1978
  %v2011 = vmax.f32 %v1877, %v1979
  %v2012 = vmax.f32 %v1880, %v1980
  %v2013 = vmax.f32 %v1885, %v1981
  %v2014 = vmax.f32 %v1888, %v1982
  %v2015 = vmax.f32 %v1893, %v1983
  %v2016 = vmax.f32 %v1896, %v1984
  %v2017 = vmax.f32 %v1901, %v1985
  %v2018 = vmax.f32 %v1904, %v1986
  %v2019 = vmax.f32 %v1909, %v1987
  %v2020 = vmax.f32 %v1912, %v1988
  %v2021 = vmax.f32 %v1917, %v1989
  %v2022 = vmax.f32 %v1920, %v1990
  %v2023 = vmax.f32 %v1925, %v1991
  %v2024 = vmax.f32 %v1928, %v1992
  %v2025 = vmax.f32 %v1933, %v1993
  %v2026 = vmax.f32 %v1936, %v1994
  %v2027 = vmax.f32 %v1941, %v1995
  %v2028 = vmax.f32 %v1944, %v1996
  %v2029 = vmax.f32 %v1949, %v1997
  %v2030 = vmax.f32 %v1952, %v1998
  %v2031 = vmax.f32 %v1957, %v1999
  %v2032 = vmax.f32 %v1960, %v2000
  %v2033 = vmax.f32 %v1965, %v2001
  %v2034 = vmax.f32 %v1968, %v2002
  %v2035 = vpack.c.bf16 %v2004, %v2003
  %v2036 = vpack.c.bf16 %v2006, %v2005
  %v2037 = vpack.c.bf16 %v2008, %v2007
  %v2038 = vpack.c.bf16 %v2010, %v2009
  %v2039 = vpack.c.bf16 %v2012, %v2011
  %v2040 = vpack.c.bf16 %v2014, %v2013
  %v2041 = vpack.c.bf16 %v2016, %v2015
  %v2042 = vpack.c.bf16 %v2018, %v2017
  %v2043 = vpack.c.bf16 %v2020, %v2019
  %v2044 = vpack.c.bf16 %v2022, %v2021
  %v2045 = vpack.c.bf16 %v2024, %v2023
  %v2046 = vpack.c.bf16 %v2026, %v2025
  %v2047 = vpack.c.bf16 %v2028, %v2027
  %v2048 = vpack.c.bf16 %v2030, %v2029
  %v2049 = vpack.c.bf16 %v2032, %v2031
  %v2050 = vpack.c.bf16 %v2034, %v2033
  %s2051 = scalar_lea.vmem %s2, 256
  %v2052 = vld [vmem:[%s2051] sm:$0xf]
  %v2053 = vld [vmem:[%s2051 + $0x4] sm:$0xf]
  %v2054 = vld [vmem:[%s2051 + $0x8] sm:$0xf]
  %v2055 = vld [vmem:[%s2051 + $0xc] sm:$0xf]
  %v2056 = vld [vmem:[%s2051 + $0x10] sm:$0xf]
  %v2057 = vld [vmem:[%s2051 + $0x14] sm:$0xf]
  %v2058 = vld [vmem:[%s2051 + $0x18] sm:$0xf]
  %v2059 = vld [vmem:[%s2051 + $0x1c] sm:$0xf]
  %v2060 = vld [vmem:[%s2051 + $0x20] sm:$0xf]
  %v2061 = vld [vmem:[%s2051 + $0x24] sm:$0xf]
  %v2062 = vld [vmem:[%s2051 + $0x28] sm:$0xf]
  %v2063 = vld [vmem:[%s2051 + $0x2c] sm:$0xf]
  %v2064 = vld [vmem:[%s2051 + $0x30] sm:$0xf]
  %v2065 = vld [vmem:[%s2051 + $0x34] sm:$0xf]
  %v2066 = vld [vmem:[%s2051 + $0x38] sm:$0xf]
  %v2067 = vld [vmem:[%s2051 + $0x3c] sm:$0xf]
  %v2068 = vld [vmem:[%s3 + $0x5] sm:$0x1]
  %v2069 = vlaneseq
  %v2070 = vshrl.u32 %v2069, 7
  %v2071 = vsub.s32 0, %v2070
  %v2072 = vrot.slane %v2068, %v2071
  %v2089 = vunpack.c.l.b16 %v2052
  %v2090 = vunpack.c.l.b16 %v2053
  %v2091 = vunpack.c.l.b16 %v2054
  %v2092 = vunpack.c.l.b16 %v2055
  %v2093 = vunpack.c.l.b16 %v2056
  %v2094 = vunpack.c.l.b16 %v2057
  %v2095 = vunpack.c.l.b16 %v2058
  %v2096 = vunpack.c.l.b16 %v2059
  %v2097 = vunpack.c.l.b16 %v2060
  %v2098 = vunpack.c.l.b16 %v2061
  %v2099 = vunpack.c.l.b16 %v2062
  %v2100 = vunpack.c.l.b16 %v2063
  %v2101 = vunpack.c.l.b16 %v2064
  %v2102 = vunpack.c.l.b16 %v2065
  %v2103 = vunpack.c.l.b16 %v2066
  %v2104 = vunpack.c.l.b16 %v2067
  %v2105 = vpack.c.b16 %v2090, %v2089
  %v2106 = vpack.c.b16 %v2092, %v2091
  %v2107 = vpack.c.b16 %v2094, %v2093
  %v2108 = vpack.c.b16 %v2096, %v2095
  %v2109 = vpack.c.b16 %v2098, %v2097
  %v2110 = vpack.c.b16 %v2100, %v2099
  %v2111 = vpack.c.b16 %v2102, %v2101
  %v2112 = vpack.c.b16 %v2104, %v2103
  %2121 = vmatprep.subr.bf16.mxu0 0
  %2122 = vmatpush1.bf16.msra.mxu0 %v2112
  %2123 = vmatprep.subr.bf16.mxu0 0
  %2124 = vmatpush1.bf16.msra.mxu0 %v2111
  %2125 = vmatprep.subr.bf16.mxu0 0
  %2126 = vmatpush1.bf16.msra.mxu0 %v2110
  %2127 = vmatprep.subr.bf16.mxu0 0
  %2128 = vmatpush1.bf16.msra.mxu0 %v2109
  %2129 = vmatprep.subr.bf16.mxu0 0
  %2130 = vmatpush1.bf16.msra.mxu0 %v2108
  %2131 = vmatprep.subr.bf16.mxu0 0
  %2132 = vmatpush1.bf16.msra.mxu0 %v2107
  %2133 = vmatprep.subr.bf16.mxu0 0
  %2134 = vmatpush1.bf16.msra.mxu0 %v2106
  %2135 = vmatprep.subr.bf16.mxu0 0
  %2136 = vmatpush1.bf16.msra.mxu0 %v2105
  %2137 = vmatprep.subr.bf16.mxu0 0
  %2138 = vmatpush2.bf16.msra.mxu0 0
  %2139 = vmatprep.subr.bf16.mxu0 0
  %2140 = vmatpush2.bf16.msra.mxu0 0
  %2141 = vmatprep.subr.bf16.mxu0 0
  %2142 = vmatpush2.bf16.msra.mxu0 0
  %2143 = vmatprep.subr.bf16.mxu0 0
  %2144 = vmatpush2.bf16.msra.mxu0 0
  %2145 = vmatprep.subr.bf16.mxu0 0
  %2146 = vmatpush2.bf16.msra.mxu0 0
  %2147 = vmatprep.subr.bf16.mxu0 0
  %2148 = vmatpush2.bf16.msra.mxu0 0
  %2149 = vmatprep.subr.bf16.mxu0 0
  %2150 = vmatpush2.bf16.msra.mxu0 0
  %2151 = vmatprep.subr.bf16.mxu0 0
  %2152 = vmatpush2.bf16.msra.mxu0 0
  %2153 = vmatprep.mubr.bf16.mxu0 0
  %2154 = vmatmul.mubr.bf16.gmra.mxu0 %v2035
  %v2155 = vpop.f32.mrf.mxu0
  %v2156 = vadd.f32 %v2072, %v2155
  %v2157 = vpop.f32.mrf.mxu0
  %v2158 = vpop.f32.mrf.mxu0
  %v2159 = vadd.f32 %v2072, %v2158
  %v2160 = vpop.f32.mrf.mxu0
  %2161 = vmatprep.mubr.bf16.mxu0 0
  %2162 = vmatmul.mubr.bf16.gmra.mxu0 %v2036
  %v2163 = vpop.f32.mrf.mxu0
  %v2164 = vadd.f32 %v2072, %v2163
  %v2165 = vpop.f32.mrf.mxu0
  %v2166 = vpop.f32.mrf.mxu0
  %v2167 = vadd.f32 %v2072, %v2166
  %v2168 = vpop.f32.mrf.mxu0
  %2169 = vmatprep.mubr.bf16.mxu0 0
  %2170 = vmatmul.mubr.bf16.gmra.mxu0 %v2037
  %v2171 = vpop.f32.mrf.mxu0
  %v2172 = vadd.f32 %v2072, %v2171
  %v2173 = vpop.f32.mrf.mxu0
  %v2174 = vpop.f32.mrf.mxu0
  %v2175 = vadd.f32 %v2072, %v2174
  %v2176 = vpop.f32.mrf.mxu0
  %2177 = vmatprep.mubr.bf16.mxu0 0
  %2178 = vmatmul.mubr.bf16.gmra.mxu0 %v2038
  %v2179 = vpop.f32.mrf.mxu0
  %v2180 = vadd.f32 %v2072, %v2179
  %v2181 = vpop.f32.mrf.mxu0
  %v2182 = vpop.f32.mrf.mxu0
  %v2183 = vadd.f32 %v2072, %v2182
  %v2184 = vpop.f32.mrf.mxu0
  %2185 = vmatprep.mubr.bf16.mxu0 0
  %2186 = vmatmul.mubr.bf16.gmra.mxu0 %v2039
  %v2187 = vpop.f32.mrf.mxu0
  %v2188 = vadd.f32 %v2072, %v2187
  %v2189 = vpop.f32.mrf.mxu0
  %v2190 = vpop.f32.mrf.mxu0
  %v2191 = vadd.f32 %v2072, %v2190
  %v2192 = vpop.f32.mrf.mxu0
  %2193 = vmatprep.mubr.bf16.mxu0 0
  %2194 = vmatmul.mubr.bf16.gmra.mxu0 %v2040
  %v2195 = vpop.f32.mrf.mxu0
  %v2196 = vadd.f32 %v2072, %v2195
  %v2197 = vpop.f32.mrf.mxu0
  %v2198 = vpop.f32.mrf.mxu0
  %v2199 = vadd.f32 %v2072, %v2198
  %v2200 = vpop.f32.mrf.mxu0
  %2201 = vmatprep.mubr.bf16.mxu0 0
  %2202 = vmatmul.mubr.bf16.gmra.mxu0 %v2041
  %v2203 = vpop.f32.mrf.mxu0
  %v2204 = vadd.f32 %v2072, %v2203
  %v2205 = vpop.f32.mrf.mxu0
  %v2206 = vpop.f32.mrf.mxu0
  %v2207 = vadd.f32 %v2072, %v2206
  %v2208 = vpop.f32.mrf.mxu0
  %2209 = vmatprep.mubr.bf16.mxu0 0
  %2210 = vmatmul.mubr.bf16.gmra.mxu0 %v2042
  %v2211 = vpop.f32.mrf.mxu0
  %v2212 = vadd.f32 %v2072, %v2211
  %v2213 = vpop.f32.mrf.mxu0
  %v2214 = vpop.f32.mrf.mxu0
  %v2215 = vadd.f32 %v2072, %v2214
  %v2216 = vpop.f32.mrf.mxu0
  %2217 = vmatprep.mubr.bf16.mxu0 0
  %2218 = vmatmul.mubr.bf16.gmra.mxu0 %v2043
  %v2219 = vpop.f32.mrf.mxu0
  %v2220 = vadd.f32 %v2072, %v2219
  %v2221 = vpop.f32.mrf.mxu0
  %v2222 = vpop.f32.mrf.mxu0
  %v2223 = vadd.f32 %v2072, %v2222
  %v2224 = vpop.f32.mrf.mxu0
  %2225 = vmatprep.mubr.bf16.mxu0 0
  %2226 = vmatmul.mubr.bf16.gmra.mxu0 %v2044
  %v2227 = vpop.f32.mrf.mxu0
  %v2228 = vadd.f32 %v2072, %v2227
  %v2229 = vpop.f32.mrf.mxu0
  %v2230 = vpop.f32.mrf.mxu0
  %v2231 = vadd.f32 %v2072, %v2230
  %v2232 = vpop.f32.mrf.mxu0
  %2233 = vmatprep.mubr.bf16.mxu0 0
  %2234 = vmatmul.mubr.bf16.gmra.mxu0 %v2045
  %v2235 = vpop.f32.mrf.mxu0
  %v2236 = vadd.f32 %v2072, %v2235
  %v2237 = vpop.f32.mrf.mxu0
  %v2238 = vpop.f32.mrf.mxu0
  %v2239 = vadd.f32 %v2072, %v2238
  %v2240 = vpop.f32.mrf.mxu0
  %2241 = vmatprep.mubr.bf16.mxu0 0
  %2242 = vmatmul.mubr.bf16.gmra.mxu0 %v2046
  %v2243 = vpop.f32.mrf.mxu0
  %v2244 = vadd.f32 %v2072, %v2243
  %v2245 = vpop.f32.mrf.mxu0
  %v2246 = vpop.f32.mrf.mxu0
  %v2247 = vadd.f32 %v2072, %v2246
  %v2248 = vpop.f32.mrf.mxu0
  %2249 = vmatprep.mubr.bf16.mxu0 0
  %2250 = vmatmul.mubr.bf16.gmra.mxu0 %v2047
  %v2251 = vpop.f32.mrf.mxu0
  %v2252 = vadd.f32 %v2072, %v2251
  %v2253 = vpop.f32.mrf.mxu0
  %v2254 = vpop.f32.mrf.mxu0
  %v2255 = vadd.f32 %v2072, %v2254
  %v2256 = vpop.f32.mrf.mxu0
  %2257 = vmatprep.mubr.bf16.mxu0 0
  %2258 = vmatmul.mubr.bf16.gmra.mxu0 %v2048
  %v2259 = vpop.f32.mrf.mxu0
  %v2260 = vadd.f32 %v2072, %v2259
  %v2261 = vpop.f32.mrf.mxu0
  %v2262 = vpop.f32.mrf.mxu0
  %v2263 = vadd.f32 %v2072, %v2262
  %v2264 = vpop.f32.mrf.mxu0
  %2265 = vmatprep.mubr.bf16.mxu0 0
  %2266 = vmatmul.mubr.bf16.gmra.mxu0 %v2049
  %v2267 = vpop.f32.mrf.mxu0
  %v2268 = vadd.f32 %v2072, %v2267
  %v2269 = vpop.f32.mrf.mxu0
  %v2270 = vpop.f32.mrf.mxu0
  %v2271 = vadd.f32 %v2072, %v2270
  %v2272 = vpop.f32.mrf.mxu0
  %2273 = vmatprep.mubr.bf16.mxu0 0
  %2274 = vmatmul.mubr.bf16.gmra.mxu0 %v2050
  %v2275 = vpop.f32.mrf.mxu0
  %v2276 = vadd.f32 %v2072, %v2275
  %v2277 = vpop.f32.mrf.mxu0
  %v2278 = vpop.f32.mrf.mxu0
  %v2279 = vadd.f32 %v2072, %v2278
  %v2280 = vpop.f32.mrf.mxu0
  %2281 = vdwg.mxu0
  %v2282 = vmul.f32 %v2156, 0.2
  %v2283 = vmul.f32 %v2159, 0.2
  %v2284 = vmul.f32 %v2164, 0.2
  %v2285 = vmul.f32 %v2167, 0.2
  %v2286 = vmul.f32 %v2172, 0.2
  %v2287 = vmul.f32 %v2175, 0.2
  %v2288 = vmul.f32 %v2180, 0.2
  %v2289 = vmul.f32 %v2183, 0.2
  %v2290 = vmul.f32 %v2188, 0.2
  %v2291 = vmul.f32 %v2191, 0.2
  %v2292 = vmul.f32 %v2196, 0.2
  %v2293 = vmul.f32 %v2199, 0.2
  %v2294 = vmul.f32 %v2204, 0.2
  %v2295 = vmul.f32 %v2207, 0.2
  %v2296 = vmul.f32 %v2212, 0.2
  %v2297 = vmul.f32 %v2215, 0.2
  %v2298 = vmul.f32 %v2220, 0.2
  %v2299 = vmul.f32 %v2223, 0.2
  %v2300 = vmul.f32 %v2228, 0.2
  %v2301 = vmul.f32 %v2231, 0.2
  %v2302 = vmul.f32 %v2236, 0.2
  %v2303 = vmul.f32 %v2239, 0.2
  %v2304 = vmul.f32 %v2244, 0.2
  %v2305 = vmul.f32 %v2247, 0.2
  %v2306 = vmul.f32 %v2252, 0.2
  %v2307 = vmul.f32 %v2255, 0.2
  %v2308 = vmul.f32 %v2260, 0.2
  %v2309 = vmul.f32 %v2263, 0.2
  %v2310 = vmul.f32 %v2268, 0.2
  %v2311 = vmul.f32 %v2271, 0.2
  %v2312 = vmul.f32 %v2276, 0.2
  %v2313 = vmul.f32 %v2279, 0.2
  %v2314 = vmax.f32 %v2156, %v2282
  %v2315 = vmax.f32 %v2159, %v2283
  %v2316 = vmax.f32 %v2164, %v2284
  %v2317 = vmax.f32 %v2167, %v2285
  %v2318 = vmax.f32 %v2172, %v2286
  %v2319 = vmax.f32 %v2175, %v2287
  %v2320 = vmax.f32 %v2180, %v2288
  %v2321 = vmax.f32 %v2183, %v2289
  %v2322 = vmax.f32 %v2188, %v2290
  %v2323 = vmax.f32 %v2191, %v2291
  %v2324 = vmax.f32 %v2196, %v2292
  %v2325 = vmax.f32 %v2199, %v2293
  %v2326 = vmax.f32 %v2204, %v2294
  %v2327 = vmax.f32 %v2207, %v2295
  %v2328 = vmax.f32 %v2212, %v2296
  %v2329 = vmax.f32 %v2215, %v2297
  %v2330 = vmax.f32 %v2220, %v2298
  %v2331 = vmax.f32 %v2223, %v2299
  %v2332 = vmax.f32 %v2228, %v2300
  %v2333 = vmax.f32 %v2231, %v2301
  %v2334 = vmax.f32 %v2236, %v2302
  %v2335 = vmax.f32 %v2239, %v2303
  %v2336 = vmax.f32 %v2244, %v2304
  %v2337 = vmax.f32 %v2247, %v2305
  %v2338 = vmax.f32 %v2252, %v2306
  %v2339 = vmax.f32 %v2255, %v2307
  %v2340 = vmax.f32 %v2260, %v2308
  %v2341 = vmax.f32 %v2263, %v2309
  %v2342 = vmax.f32 %v2268, %v2310
  %v2343 = vmax.f32 %v2271, %v2311
  %v2344 = vmax.f32 %v2276, %v2312
  %v2345 = vmax.f32 %v2279, %v2313
  %v2346 = vpack.c.bf16 %v2315, %v2314
  %v2347 = vpack.c.bf16 %v2317, %v2316
  %v2348 = vpack.c.bf16 %v2319, %v2318
  %v2349 = vpack.c.bf16 %v2321, %v2320
  %v2350 = vpack.c.bf16 %v2323, %v2322
  %v2351 = vpack.c.bf16 %v2325, %v2324
  %v2352 = vpack.c.bf16 %v2327, %v2326
  %v2353 = vpack.c.bf16 %v2329, %v2328
  %v2354 = vpack.c.bf16 %v2331, %v2330
  %v2355 = vpack.c.bf16 %v2333, %v2332
  %v2356 = vpack.c.bf16 %v2335, %v2334
  %v2357 = vpack.c.bf16 %v2337, %v2336
  %v2358 = vpack.c.bf16 %v2339, %v2338
  %v2359 = vpack.c.bf16 %v2341, %v2340
  %v2360 = vpack.c.bf16 %v2343, %v2342
  %v2361 = vpack.c.bf16 %v2345, %v2344
  %s2362 = scalar_lea.vmem %s2, 320
  %v2363 = vld [vmem:[%s2362] sm:$0xf]
  %v2364 = vld [vmem:[%s2362 + $0x4] sm:$0xf]
  %v2365 = vld [vmem:[%s2362 + $0x8] sm:$0xf]
  %v2366 = vld [vmem:[%s2362 + $0xc] sm:$0xf]
  %v2367 = vld [vmem:[%s2362 + $0x10] sm:$0xf]
  %v2368 = vld [vmem:[%s2362 + $0x14] sm:$0xf]
  %v2369 = vld [vmem:[%s2362 + $0x18] sm:$0xf]
  %v2370 = vld [vmem:[%s2362 + $0x1c] sm:$0xf]
  %v2371 = vld [vmem:[%s2362 + $0x20] sm:$0xf]
  %v2372 = vld [vmem:[%s2362 + $0x24] sm:$0xf]
  %v2373 = vld [vmem:[%s2362 + $0x28] sm:$0xf]
  %v2374 = vld [vmem:[%s2362 + $0x2c] sm:$0xf]
  %v2375 = vld [vmem:[%s2362 + $0x30] sm:$0xf]
  %v2376 = vld [vmem:[%s2362 + $0x34] sm:$0xf]
  %v2377 = vld [vmem:[%s2362 + $0x38] sm:$0xf]
  %v2378 = vld [vmem:[%s2362 + $0x3c] sm:$0xf]
  %v2379 = vld [vmem:[%s3 + $0x6] sm:$0x1]
  %v2380 = vlaneseq
  %v2381 = vshrl.u32 %v2380, 7
  %v2382 = vsub.s32 0, %v2381
  %v2383 = vrot.slane %v2379, %v2382
  %v2400 = vunpack.c.l.b16 %v2363
  %v2401 = vunpack.c.l.b16 %v2364
  %v2402 = vunpack.c.l.b16 %v2365
  %v2403 = vunpack.c.l.b16 %v2366
  %v2404 = vunpack.c.l.b16 %v2367
  %v2405 = vunpack.c.l.b16 %v2368
  %v2406 = vunpack.c.l.b16 %v2369
  %v2407 = vunpack.c.l.b16 %v2370
  %v2408 = vunpack.c.l.b16 %v2371
  %v2409 = vunpack.c.l.b16 %v2372
  %v2410 = vunpack.c.l.b16 %v2373
  %v2411 = vunpack.c.l.b16 %v2374
  %v2412 = vunpack.c.l.b16 %v2375
  %v2413 = vunpack.c.l.b16 %v2376
  %v2414 = vunpack.c.l.b16 %v2377
  %v2415 = vunpack.c.l.b16 %v2378
  %v2416 = vpack.c.b16 %v2401, %v2400
  %v2417 = vpack.c.b16 %v2403, %v2402
  %v2418 = vpack.c.b16 %v2405, %v2404
  %v2419 = vpack.c.b16 %v2407, %v2406
  %v2420 = vpack.c.b16 %v2409, %v2408
  %v2421 = vpack.c.b16 %v2411, %v2410
  %v2422 = vpack.c.b16 %v2413, %v2412
  %v2423 = vpack.c.b16 %v2415, %v2414
  %2432 = vmatprep.subr.bf16.mxu0 0
  %2433 = vmatpush1.bf16.msra.mxu0 %v2423
  %2434 = vmatprep.subr.bf16.mxu0 0
  %2435 = vmatpush1.bf16.msra.mxu0 %v2422
  %2436 = vmatprep.subr.bf16.mxu0 0
  %2437 = vmatpush1.bf16.msra.mxu0 %v2421
  %2438 = vmatprep.subr.bf16.mxu0 0
  %2439 = vmatpush1.bf16.msra.mxu0 %v2420
  %2440 = vmatprep.subr.bf16.mxu0 0
  %2441 = vmatpush1.bf16.msra.mxu0 %v2419
  %2442 = vmatprep.subr.bf16.mxu0 0
  %2443 = vmatpush1.bf16.msra.mxu0 %v2418
  %2444 = vmatprep.subr.bf16.mxu0 0
  %2445 = vmatpush1.bf16.msra.mxu0 %v2417
  %2446 = vmatprep.subr.bf16.mxu0 0
  %2447 = vmatpush1.bf16.msra.mxu0 %v2416
  %2448 = vmatprep.subr.bf16.mxu0 0
  %2449 = vmatpush2.bf16.msra.mxu0 0
  %2450 = vmatprep.subr.bf16.mxu0 0
  %2451 = vmatpush2.bf16.msra.mxu0 0
  %2452 = vmatprep.subr.bf16.mxu0 0
  %2453 = vmatpush2.bf16.msra.mxu0 0
  %2454 = vmatprep.subr.bf16.mxu0 0
  %2455 = vmatpush2.bf16.msra.mxu0 0
  %2456 = vmatprep.subr.bf16.mxu0 0
  %2457 = vmatpush2.bf16.msra.mxu0 0
  %2458 = vmatprep.subr.bf16.mxu0 0
  %2459 = vmatpush2.bf16.msra.mxu0 0
  %2460 = vmatprep.subr.bf16.mxu0 0
  %2461 = vmatpush2.bf16.msra.mxu0 0
  %2462 = vmatprep.subr.bf16.mxu0 0
  %2463 = vmatpush2.bf16.msra.mxu0 0
  %2464 = vmatprep.mubr.bf16.mxu0 0
  %2465 = vmatmul.mubr.bf16.gmra.mxu0 %v2346
  %v2466 = vpop.f32.mrf.mxu0
  %v2467 = vadd.f32 %v2383, %v2466
  %v2468 = vpop.f32.mrf.mxu0
  %v2469 = vpop.f32.mrf.mxu0
  %v2470 = vadd.f32 %v2383, %v2469
  %v2471 = vpop.f32.mrf.mxu0
  %2472 = vmatprep.mubr.bf16.mxu0 0
  %2473 = vmatmul.mubr.bf16.gmra.mxu0 %v2347
  %v2474 = vpop.f32.mrf.mxu0
  %v2475 = vadd.f32 %v2383, %v2474
  %v2476 = vpop.f32.mrf.mxu0
  %v2477 = vpop.f32.mrf.mxu0
  %v2478 = vadd.f32 %v2383, %v2477
  %v2479 = vpop.f32.mrf.mxu0
  %2480 = vmatprep.mubr.bf16.mxu0 0
  %2481 = vmatmul.mubr.bf16.gmra.mxu0 %v2348
  %v2482 = vpop.f32.mrf.mxu0
  %v2483 = vadd.f32 %v2383, %v2482
  %v2484 = vpop.f32.mrf.mxu0
  %v2485 = vpop.f32.mrf.mxu0
  %v2486 = vadd.f32 %v2383, %v2485
  %v2487 = vpop.f32.mrf.mxu0
  %2488 = vmatprep.mubr.bf16.mxu0 0
  %2489 = vmatmul.mubr.bf16.gmra.mxu0 %v2349
  %v2490 = vpop.f32.mrf.mxu0
  %v2491 = vadd.f32 %v2383, %v2490
  %v2492 = vpop.f32.mrf.mxu0
  %v2493 = vpop.f32.mrf.mxu0
  %v2494 = vadd.f32 %v2383, %v2493
  %v2495 = vpop.f32.mrf.mxu0
  %2496 = vmatprep.mubr.bf16.mxu0 0
  %2497 = vmatmul.mubr.bf16.gmra.mxu0 %v2350
  %v2498 = vpop.f32.mrf.mxu0
  %v2499 = vadd.f32 %v2383, %v2498
  %v2500 = vpop.f32.mrf.mxu0
  %v2501 = vpop.f32.mrf.mxu0
  %v2502 = vadd.f32 %v2383, %v2501
  %v2503 = vpop.f32.mrf.mxu0
  %2504 = vmatprep.mubr.bf16.mxu0 0
  %2505 = vmatmul.mubr.bf16.gmra.mxu0 %v2351
  %v2506 = vpop.f32.mrf.mxu0
  %v2507 = vadd.f32 %v2383, %v2506
  %v2508 = vpop.f32.mrf.mxu0
  %v2509 = vpop.f32.mrf.mxu0
  %v2510 = vadd.f32 %v2383, %v2509
  %v2511 = vpop.f32.mrf.mxu0
  %2512 = vmatprep.mubr.bf16.mxu0 0
  %2513 = vmatmul.mubr.bf16.gmra.mxu0 %v2352
  %v2514 = vpop.f32.mrf.mxu0
  %v2515 = vadd.f32 %v2383, %v2514
  %v2516 = vpop.f32.mrf.mxu0
  %v2517 = vpop.f32.mrf.mxu0
  %v2518 = vadd.f32 %v2383, %v2517
  %v2519 = vpop.f32.mrf.mxu0
  %2520 = vmatprep.mubr.bf16.mxu0 0
  %2521 = vmatmul.mubr.bf16.gmra.mxu0 %v2353
  %v2522 = vpop.f32.mrf.mxu0
  %v2523 = vadd.f32 %v2383, %v2522
  %v2524 = vpop.f32.mrf.mxu0
  %v2525 = vpop.f32.mrf.mxu0
  %v2526 = vadd.f32 %v2383, %v2525
  %v2527 = vpop.f32.mrf.mxu0
  %2528 = vmatprep.mubr.bf16.mxu0 0
  %2529 = vmatmul.mubr.bf16.gmra.mxu0 %v2354
  %v2530 = vpop.f32.mrf.mxu0
  %v2531 = vadd.f32 %v2383, %v2530
  %v2532 = vpop.f32.mrf.mxu0
  %v2533 = vpop.f32.mrf.mxu0
  %v2534 = vadd.f32 %v2383, %v2533
  %v2535 = vpop.f32.mrf.mxu0
  %2536 = vmatprep.mubr.bf16.mxu0 0
  %2537 = vmatmul.mubr.bf16.gmra.mxu0 %v2355
  %v2538 = vpop.f32.mrf.mxu0
  %v2539 = vadd.f32 %v2383, %v2538
  %v2540 = vpop.f32.mrf.mxu0
  %v2541 = vpop.f32.mrf.mxu0
  %v2542 = vadd.f32 %v2383, %v2541
  %v2543 = vpop.f32.mrf.mxu0
  %2544 = vmatprep.mubr.bf16.mxu0 0
  %2545 = vmatmul.mubr.bf16.gmra.mxu0 %v2356
  %v2546 = vpop.f32.mrf.mxu0
  %v2547 = vadd.f32 %v2383, %v2546
  %v2548 = vpop.f32.mrf.mxu0
  %v2549 = vpop.f32.mrf.mxu0
  %v2550 = vadd.f32 %v2383, %v2549
  %v2551 = vpop.f32.mrf.mxu0
  %2552 = vmatprep.mubr.bf16.mxu0 0
  %2553 = vmatmul.mubr.bf16.gmra.mxu0 %v2357
  %v2554 = vpop.f32.mrf.mxu0
  %v2555 = vadd.f32 %v2383, %v2554
  %v2556 = vpop.f32.mrf.mxu0
  %v2557 = vpop.f32.mrf.mxu0
  %v2558 = vadd.f32 %v2383, %v2557
  %v2559 = vpop.f32.mrf.mxu0
  %2560 = vmatprep.mubr.bf16.mxu0 0
  %2561 = vmatmul.mubr.bf16.gmra.mxu0 %v2358
  %v2562 = vpop.f32.mrf.mxu0
  %v2563 = vadd.f32 %v2383, %v2562
  %v2564 = vpop.f32.mrf.mxu0
  %v2565 = vpop.f32.mrf.mxu0
  %v2566 = vadd.f32 %v2383, %v2565
  %v2567 = vpop.f32.mrf.mxu0
  %2568 = vmatprep.mubr.bf16.mxu0 0
  %2569 = vmatmul.mubr.bf16.gmra.mxu0 %v2359
  %v2570 = vpop.f32.mrf.mxu0
  %v2571 = vadd.f32 %v2383, %v2570
  %v2572 = vpop.f32.mrf.mxu0
  %v2573 = vpop.f32.mrf.mxu0
  %v2574 = vadd.f32 %v2383, %v2573
  %v2575 = vpop.f32.mrf.mxu0
  %2576 = vmatprep.mubr.bf16.mxu0 0
  %2577 = vmatmul.mubr.bf16.gmra.mxu0 %v2360
  %v2578 = vpop.f32.mrf.mxu0
  %v2579 = vadd.f32 %v2383, %v2578
  %v2580 = vpop.f32.mrf.mxu0
  %v2581 = vpop.f32.mrf.mxu0
  %v2582 = vadd.f32 %v2383, %v2581
  %v2583 = vpop.f32.mrf.mxu0
  %2584 = vmatprep.mubr.bf16.mxu0 0
  %2585 = vmatmul.mubr.bf16.gmra.mxu0 %v2361
  %v2586 = vpop.f32.mrf.mxu0
  %v2587 = vadd.f32 %v2383, %v2586
  %v2588 = vpop.f32.mrf.mxu0
  %v2589 = vpop.f32.mrf.mxu0
  %v2590 = vadd.f32 %v2383, %v2589
  %v2591 = vpop.f32.mrf.mxu0
  %2592 = vdwg.mxu0
  %v2593 = vmul.f32 %v2467, 0.2
  %v2594 = vmul.f32 %v2470, 0.2
  %v2595 = vmul.f32 %v2475, 0.2
  %v2596 = vmul.f32 %v2478, 0.2
  %v2597 = vmul.f32 %v2483, 0.2
  %v2598 = vmul.f32 %v2486, 0.2
  %v2599 = vmul.f32 %v2491, 0.2
  %v2600 = vmul.f32 %v2494, 0.2
  %v2601 = vmul.f32 %v2499, 0.2
  %v2602 = vmul.f32 %v2502, 0.2
  %v2603 = vmul.f32 %v2507, 0.2
  %v2604 = vmul.f32 %v2510, 0.2
  %v2605 = vmul.f32 %v2515, 0.2
  %v2606 = vmul.f32 %v2518, 0.2
  %v2607 = vmul.f32 %v2523, 0.2
  %v2608 = vmul.f32 %v2526, 0.2
  %v2609 = vmul.f32 %v2531, 0.2
  %v2610 = vmul.f32 %v2534, 0.2
  %v2611 = vmul.f32 %v2539, 0.2
  %v2612 = vmul.f32 %v2542, 0.2
  %v2613 = vmul.f32 %v2547, 0.2
  %v2614 = vmul.f32 %v2550, 0.2
  %v2615 = vmul.f32 %v2555, 0.2
  %v2616 = vmul.f32 %v2558, 0.2
  %v2617 = vmul.f32 %v2563, 0.2
  %v2618 = vmul.f32 %v2566, 0.2
  %v2619 = vmul.f32 %v2571, 0.2
  %v2620 = vmul.f32 %v2574, 0.2
  %v2621 = vmul.f32 %v2579, 0.2
  %v2622 = vmul.f32 %v2582, 0.2
  %v2623 = vmul.f32 %v2587, 0.2
  %v2624 = vmul.f32 %v2590, 0.2
  %v2625 = vmax.f32 %v2467, %v2593
  %v2626 = vmax.f32 %v2470, %v2594
  %v2627 = vmax.f32 %v2475, %v2595
  %v2628 = vmax.f32 %v2478, %v2596
  %v2629 = vmax.f32 %v2483, %v2597
  %v2630 = vmax.f32 %v2486, %v2598
  %v2631 = vmax.f32 %v2491, %v2599
  %v2632 = vmax.f32 %v2494, %v2600
  %v2633 = vmax.f32 %v2499, %v2601
  %v2634 = vmax.f32 %v2502, %v2602
  %v2635 = vmax.f32 %v2507, %v2603
  %v2636 = vmax.f32 %v2510, %v2604
  %v2637 = vmax.f32 %v2515, %v2605
  %v2638 = vmax.f32 %v2518, %v2606
  %v2639 = vmax.f32 %v2523, %v2607
  %v2640 = vmax.f32 %v2526, %v2608
  %v2641 = vmax.f32 %v2531, %v2609
  %v2642 = vmax.f32 %v2534, %v2610
  %v2643 = vmax.f32 %v2539, %v2611
  %v2644 = vmax.f32 %v2542, %v2612
  %v2645 = vmax.f32 %v2547, %v2613
  %v2646 = vmax.f32 %v2550, %v2614
  %v2647 = vmax.f32 %v2555, %v2615
  %v2648 = vmax.f32 %v2558, %v2616
  %v2649 = vmax.f32 %v2563, %v2617
  %v2650 = vmax.f32 %v2566, %v2618
  %v2651 = vmax.f32 %v2571, %v2619
  %v2652 = vmax.f32 %v2574, %v2620
  %v2653 = vmax.f32 %v2579, %v2621
  %v2654 = vmax.f32 %v2582, %v2622
  %v2655 = vmax.f32 %v2587, %v2623
  %v2656 = vmax.f32 %v2590, %v2624
  %2657 = vst [vmem:[%s4] sm:$0xff] %v2625
  %2658 = vst [vmem:[%s4 + $0x8] sm:$0xff] %v2626
  %2659 = vst [vmem:[%s4 + $0x10] sm:$0xff] %v2627
  %2660 = vst [vmem:[%s4 + $0x18] sm:$0xff] %v2628
  %2661 = vst [vmem:[%s4 + $0x20] sm:$0xff] %v2629
  %2662 = vst [vmem:[%s4 + $0x28] sm:$0xff] %v2630
  %2663 = vst [vmem:[%s4 + $0x30] sm:$0xff] %v2631
  %2664 = vst [vmem:[%s4 + $0x38] sm:$0xff] %v2632
  %2665 = vst [vmem:[%s4 + $0x40] sm:$0xff] %v2633
  %2666 = vst [vmem:[%s4 + $0x48] sm:$0xff] %v2634
  %2667 = vst [vmem:[%s4 + $0x50] sm:$0xff] %v2635
  %2668 = vst [vmem:[%s4 + $0x58] sm:$0xff] %v2636
  %2669 = vst [vmem:[%s4 + $0x60] sm:$0xff] %v2637
  %2670 = vst [vmem:[%s4 + $0x68] sm:$0xff] %v2638
  %2671 = vst [vmem:[%s4 + $0x70] sm:$0xff] %v2639
  %2672 = vst [vmem:[%s4 + $0x78] sm:$0xff] %v2640
  %2673 = vst [vmem:[%s4 + $0x80] sm:$0xff] %v2641
  %2674 = vst [vmem:[%s4 + $0x88] sm:$0xff] %v2642
  %2675 = vst [vmem:[%s4 + $0x90] sm:$0xff] %v2643
  %2676 = vst [vmem:[%s4 + $0x98] sm:$0xff] %v2644
  %2677 = vst [vmem:[%s4 + $0xa0] sm:$0xff] %v2645
  %2678 = vst [vmem:[%s4 + $0xa8] sm:$0xff] %v2646
  %2679 = vst [vmem:[%s4 + $0xb0] sm:$0xff] %v2647
  %2680 = vst [vmem:[%s4 + $0xb8] sm:$0xff] %v2648
  %2681 = vst [vmem:[%s4 + $0xc0] sm:$0xff] %v2649
  %2682 = vst [vmem:[%s4 + $0xc8] sm:$0xff] %v2650
  %2683 = vst [vmem:[%s4 + $0xd0] sm:$0xff] %v2651
  %2684 = vst [vmem:[%s4 + $0xd8] sm:$0xff] %v2652
  %2685 = vst [vmem:[%s4 + $0xe0] sm:$0xff] %v2653
  %2686 = vst [vmem:[%s4 + $0xe8] sm:$0xff] %v2654
  %2687 = vst [vmem:[%s4 + $0xf0] sm:$0xff] %v2655
  %2688 = vst [vmem:[%s4 + $0xf8] sm:$0xff] %v2656
  // Predicated region
  $region18: #{latent_transformation_forward.1} parent=0 // pred_check
    _
  $region19: #{latent_transformation_forward.1} parent=0 // pred_check_branch
    %2690 = sbr.rel (0) target = $region21
  $region20: #{latent_transformation_forward.1} parent=0 // pred_region
    _
  $region21: #{latent_transformation_forward.1} parent=0 // pred_fallthru
    _
  // Predicated region
  $region22: #{latent_transformation_forward.1} parent=0 // pred_check
    _
  $region23: #{latent_transformation_forward.1} parent=0 // pred_check_branch
    %2692 = sbr.rel (0) target = $region25
  $region24: #{latent_transformation_forward.1} parent=0 // pred_region
    _
  $region25: #{latent_transformation_forward.1} parent=0 // pred_fallthru
    _

</llo_original>
